<compile_context>
chip_gen: v5e
topology: v5e:2x2
jax: 0.10.0
libtpu: 0.0.40
codegen_flags: <defaults>
</compile_context>

<pallas_src>
import jax
import jax.numpy as jnp
import numpy as np
from jax.experimental import pallas as pl
from jax.experimental.pallas import tpu as pltpu

HIDDEN = 96                      # hidden_size
NUM_HEADS = 2                    # num_heads
DIM_HEAD = HIDDEN // NUM_HEADS   # 48 (matches Attention default dim_head)
MLP_HIDDEN = int(HIDDEN * 4.0)   # 384
EPS = 1e-6
SCALE = DIM_HEAD ** -0.5
D_PAD = 128                      # lane-padded per-head dim (tile-aligned slices)


# --------------------------- kernel helpers ---------------------------------
def _layernorm(x):
    """LayerNorm(elementwise_affine=False) over the last (96-lane) axis."""
    mu = jnp.mean(x, axis=-1, keepdims=True)
    xc = x - mu
    var = jnp.mean(xc * xc, axis=-1, keepdims=True)
    return xc * jax.lax.rsqrt(var + EPS)


def attn_block_kernel(x_ref,
                      wqkv_ref, bqkv_ref, wo_ref, bo_ref,
                      w1_ref, b1_ref, w2_ref, b2_ref,
                      o_ref):
    bt, n, c = x_ref.shape
    m = bt * n
    x = x_ref[...].astype(jnp.float32).reshape(m, c)      # (Bt*N, 96) f32

    # ---------------- attention branch: x + attn(norm1(x)) ------------------
    xn_b = _layernorm(x).astype(jnp.bfloat16)

    # Fused q/k/v projection for both heads: columns laid out as
    # [q_h0 | q_h1 | k_h0 | k_h1 | v_h0 | v_h1], each 128 lanes wide
    # (48 useful + zero pad).  SCALE is pre-folded into the q columns.
    qkv = jnp.dot(xn_b, wqkv_ref[...],
                  preferred_element_type=jnp.float32) + bqkv_ref[...]

    # TODO(synk): attn_bias / mask path not implemented (forward default mask=None).
    outs = []
    for h in range(NUM_HEADS):
        q = qkv[:, h * D_PAD:(h + 1) * D_PAD]
        k = qkv[:, (NUM_HEADS + h) * D_PAD:(NUM_HEADS + h + 1) * D_PAD]
        v = qkv[:, (2 * NUM_HEADS + h) * D_PAD:(2 * NUM_HEADS + h + 1) * D_PAD]

        q3 = q.reshape(bt, n, D_PAD).astype(jnp.bfloat16)
        k3 = k.reshape(bt, n, D_PAD).astype(jnp.bfloat16)
        v3 = v.reshape(bt, n, D_PAD).astype(jnp.bfloat16)

        sim = jnp.einsum("bqd,bkd->bqk", q3, k3,
                         preferred_element_type=jnp.float32)      # (Bt, N, N)
        sim = sim - jnp.max(sim, axis=-1, keepdims=True)
        p = jnp.exp(sim)
        attn = p * pl.reciprocal(jnp.sum(p, axis=-1, keepdims=True), approx=True)
        out_h = jnp.einsum("bqk,bkd->bqd", attn.astype(jnp.bfloat16), v3,
                           preferred_element_type=jnp.float32)    # (Bt, N, D_PAD)
        outs.append(out_h.reshape(m, D_PAD).astype(jnp.bfloat16))

    out_cat = jnp.concatenate(outs, axis=-1)                       # (m, 2*D_PAD) bf16
    attn_out = jnp.dot(out_cat, wo_ref[...],
                       preferred_element_type=jnp.float32) + bo_ref[...]
    x = x + attn_out

    # -------------------- MLP branch: x + mlp(norm2(x)) ---------------------
    xn2 = _layernorm(x).astype(jnp.bfloat16)
    h1 = jnp.dot(xn2, w1_ref[...], preferred_element_type=jnp.float32) + b1_ref[...]
    h1 = jax.nn.gelu(h1, approximate=True).astype(jnp.bfloat16)   # GELU(tanh)
    h2 = jnp.dot(h1, w2_ref[...], preferred_element_type=jnp.float32) + b2_ref[...]
    o_ref[...] = (x + h2).reshape(bt, n, c).astype(o_ref.dtype)


# ------------------------------ wrapper --------------------------------------
def _prep_params(params):
    """Fuse q/k/v (per head, output-padded to 128 lanes) into one weight,
    fuse the per-head output projections, pre-fold SCALE into q, and cast
    matmul weights to bf16 (biases stay f32)."""
    wq, bq, wkv, bkv, wo, bo, w1, b1, w2, b2 = params
    C, H, D = HIDDEN, NUM_HEADS, DIM_HEAD
    bf16 = jnp.bfloat16

    wk, wv = wkv[:, :C], wkv[:, C:]
    bk, bv = bkv[:, :C], bkv[:, C:]

    def head_cols(w, b, scale=1.0):
        ws, bs = [], []
        for h in range(H):
            w_h = w[:, h * D:(h + 1) * D] * scale               # (C, D)
            b_h = b[:, h * D:(h + 1) * D] * scale               # (1, D)
            ws.append(jnp.pad(w_h, ((0, 0), (0, D_PAD - D))))
            bs.append(jnp.pad(b_h, ((0, 0), (0, D_PAD - D))))
        return ws, bs

    qw, qb = head_cols(wq, bq, SCALE)
    kw, kb = head_cols(wk, bk)
    vw, vb = head_cols(wv, bv)
    wqkv = jnp.concatenate(qw + kw + vw, axis=1).astype(bf16)    # (96, 6*128)
    bqkv = jnp.concatenate(qb + kb + vb, axis=1).astype(jnp.float32)

    wo_heads = [jnp.pad(wo[h * D:(h + 1) * D, :], ((0, D_PAD - D), (0, 0)))
                for h in range(H)]
    wo_cat = jnp.concatenate(wo_heads, axis=0).astype(bf16)      # (2*128, 96)

    return (wqkv, bqkv, wo_cat, bo.astype(jnp.float32),
            w1.astype(bf16), b1.astype(jnp.float32),
            w2.astype(bf16), b2.astype(jnp.float32))


def _vmem_limit_bytes():
    """75% of physical VMEM: ~96 MiB on v5e/v6e, ~48 MiB on v7x."""
    try:
        cap = int(pltpu.get_tpu_info().vmem_capacity_bytes)
        cap = max(cap, 32 * 1024 * 1024)
    except Exception:
        cap = 64 * 1024 * 1024
    return cap * 3 // 4


def _pick_block_batch(B, N, vmem_ws_budget_bytes):
    """Batch elements per grid step.  Target 1K-4K rows/step (amortizes the
    ~0.35us/step pipeline overhead), bounded by a conservative per-row VMEM
    working-set estimate (double-buffered in/out tiles + f32/bf16
    intermediates + softmax tensors)."""
    bytes_per_row = 14000 + 32 * N
    max_rows_ws = max(N, vmem_ws_budget_bytes // bytes_per_row)
    target_rows = min(4096, max_rows_ws)
    bt = max(1, min(B, target_rows // max(N, 1)))
    while B % bt != 0:
        bt -= 1
    return bt


def attn_block(x, params):
    B, N, C = x.shape
    assert C == HIDDEN
    vmem_limit = _vmem_limit_bytes()
    bt = _pick_block_batch(B, N, vmem_limit // 2)
    prepped = _prep_params(params)

    weight_spec = pl.BlockSpec(memory_space=pltpu.MemorySpace.VMEM)
    out = pl.pallas_call(
        attn_block_kernel,
        out_shape=jax.ShapeDtypeStruct((B, N, C), x.dtype),
        grid=(B // bt,),
        in_specs=[pl.BlockSpec((bt, N, C), lambda b: (b, 0, 0))]
                 + [weight_spec] * len(prepped),
        out_specs=pl.BlockSpec((bt, N, C), lambda b: (b, 0, 0)),
        compiler_params=pltpu.CompilerParams(
            dimension_semantics=("parallel",),
            vmem_limit_bytes=vmem_limit),
    )(x, *prepped)
    return out


# ------------------------- pure-JAX reference --------------------------------
def _layernorm_ref(x, eps):
    mu = jnp.mean(x, axis=-1, keepdims=True)
    var = jnp.mean(jnp.square(x - mu), axis=-1, keepdims=True)
    return (x - mu) * jax.lax.rsqrt(var + eps)


def attn_block_reference(x, params):
    wq, bq, wkv, bkv, wo, bo, w1, b1, w2, b2 = params
    B, N, C = x.shape
    h, d = NUM_HEADS, DIM_HEAD

    xn = _layernorm_ref(x, EPS)
    q = xn @ wq + bq
    kv = xn @ wkv + bkv
    k, v = kv[..., :C], kv[..., C:]
    q = q.reshape(B, N, h, d).transpose(0, 2, 1, 3)
    k = k.reshape(B, N, h, d).transpose(0, 2, 1, 3)
    v = v.reshape(B, N, h, d).transpose(0, 2, 1, 3)
    sim = jnp.einsum("bhnd,bhmd->bhnm", q, k) * SCALE
    attn = jax.nn.softmax(sim, axis=-1)
    out = jnp.einsum("bhnm,bhmd->bhnd", attn, v)
    out = out.transpose(0, 2, 1, 3).reshape(B, N, C)
    x = x + (out @ wo + bo)

    xn2 = _layernorm_ref(x, EPS)
    h1 = jax.nn.gelu(xn2 @ w1 + b1, approximate=True)
    return x + (h1 @ w2 + b2)


if __name__ == "__main__":
    B, N, C = 2, 16, HIDDEN

    key = jax.random.PRNGKey(0)
    ks = jax.random.split(key, 11)

    def w(k, shape):
        return jax.random.normal(k, shape, jnp.float32) * 0.02

    # Weights stored (in, out) = PyTorch weight.T; biases stored (1, out).
    params = (
        w(ks[0], (C, C)),                 # to_q weight (transposed)
        w(ks[1], (1, C)),                 # to_q bias
        w(ks[2], (C, 2 * C)),             # to_kv weight (transposed)
        w(ks[3], (1, 2 * C)),             # to_kv bias
        w(ks[4], (C, C)),                 # to_out weight (transposed)
        w(ks[5], (1, C)),                 # to_out bias
        w(ks[6], (C, MLP_HIDDEN)),        # mlp.fc1 weight (transposed)
        w(ks[7], (1, MLP_HIDDEN)),        # mlp.fc1 bias
        w(ks[8], (MLP_HIDDEN, C)),        # mlp.fc2 weight (transposed)
        w(ks[9], (1, C)),                 # mlp.fc2 bias
    )
    x = jax.random.normal(ks[10], (B, N, C), jnp.float32)

    out = jax.block_until_ready(attn_block(x, params))
    ref = jax.block_until_ready(attn_block_reference(x, params))

    # bf16 MXU inputs (f32 accumulation) -> compare against f32 reference
    # with a correspondingly relaxed tolerance.
    np.testing.assert_allclose(np.asarray(out), np.asarray(ref),
                               rtol=2e-2, atol=2e-2)
    print("KERNEL_OK")
</pallas_src>

<mosaic_0001>
module attributes {stable_mosaic.version = 11 : i64} {
  func.func @attn_block_kernel(%arg0: i32, %arg1: memref<2x16x96xf32, #tpu.memory_space<vmem>>, %arg2: memref<96x768xbf16, #tpu.memory_space<vmem>>, %arg3: memref<1x768xf32, #tpu.memory_space<vmem>>, %arg4: memref<256x96xbf16, #tpu.memory_space<vmem>>, %arg5: memref<1x96xf32, #tpu.memory_space<vmem>>, %arg6: memref<96x384xbf16, #tpu.memory_space<vmem>>, %arg7: memref<1x384xf32, #tpu.memory_space<vmem>>, %arg8: memref<384x96xbf16, #tpu.memory_space<vmem>>, %arg9: memref<1x96xf32, #tpu.memory_space<vmem>>, %arg10: memref<2x16x96xf32, #tpu.memory_space<vmem>>) attributes {dimension_semantics = [#tpu.dimension_semantics<parallel>], iteration_bounds = array<i64: 1>, scalar_prefetch = 0 : i64, scratch_operands = 0 : i64, tpu.core_type = #tpu.core_type<tc>, window_params = [{transform_indices = @transform_0, window_bounds = array<i64: 2, 16, 96>}, {pipeline_mode = #tpu.pipeline_mode<synchronous>, transform_indices = @transform_1, window_bounds = array<i64: 96, 768>}, {pipeline_mode = #tpu.pipeline_mode<synchronous>, transform_indices = @transform_2, window_bounds = array<i64: 1, 768>}, {pipeline_mode = #tpu.pipeline_mode<synchronous>, transform_indices = @transform_3, window_bounds = array<i64: 256, 96>}, {pipeline_mode = #tpu.pipeline_mode<synchronous>, transform_indices = @transform_4, window_bounds = array<i64: 1, 96>}, {pipeline_mode = #tpu.pipeline_mode<synchronous>, transform_indices = @transform_5, window_bounds = array<i64: 96, 384>}, {pipeline_mode = #tpu.pipeline_mode<synchronous>, transform_indices = @transform_6, window_bounds = array<i64: 1, 384>}, {pipeline_mode = #tpu.pipeline_mode<synchronous>, transform_indices = @transform_7, window_bounds = array<i64: 384, 96>}, {pipeline_mode = #tpu.pipeline_mode<synchronous>, transform_indices = @transform_8, window_bounds = array<i64: 1, 96>}, {transform_indices = @transform_9, window_bounds = array<i64: 2, 16, 96>}]} {
    %c0 = arith.constant 0 : index
    %c0_0 = arith.constant 0 : index
    %c0_1 = arith.constant 0 : index
    %0 = vector.load %arg1[%c0, %c0_0, %c0_1] : memref<2x16x96xf32, #tpu.memory_space<vmem>>, vector<2x16x96xf32>
    %1 = vector.shape_cast %0 : vector<2x16x96xf32> to vector<32x96xf32>
    %cst = arith.constant dense<0.000000e+00> : vector<32xf32>
    %2 = vector.multi_reduction <add>, %1, %cst [1] : vector<32x96xf32> to vector<32xf32>
    %3 = vector.shape_cast %2 : vector<32xf32> to vector<32x1xf32>
    %cst_2 = arith.constant 9.600000e+01 : f32
    %4 = vector.broadcast %cst_2 : f32 to vector<32x1xf32>
    %5 = arith.divf %3, %4 : vector<32x1xf32>
    %6 = vector.broadcast %5 : vector<32x1xf32> to vector<32x96xf32>
    %7 = arith.subf %1, %6 : vector<32x96xf32>
    %8 = arith.mulf %7, %7 : vector<32x96xf32>
    %cst_3 = arith.constant dense<0.000000e+00> : vector<32xf32>
    %9 = vector.multi_reduction <add>, %8, %cst_3 [1] : vector<32x96xf32> to vector<32xf32>
    %10 = vector.shape_cast %9 : vector<32xf32> to vector<32x1xf32>
    %cst_4 = arith.constant 9.600000e+01 : f32
    %11 = vector.broadcast %cst_4 : f32 to vector<32x1xf32>
    %12 = arith.divf %10, %11 : vector<32x1xf32>
    %cst_5 = arith.constant 9.99999997E-7 : f32
    %13 = vector.broadcast %cst_5 : f32 to vector<32x1xf32>
    %14 = arith.addf %12, %13 : vector<32x1xf32>
    %15 = math.rsqrt %14 : vector<32x1xf32>
    %16 = vector.broadcast %15 : vector<32x1xf32> to vector<32x96xf32>
    %17 = arith.mulf %7, %16 : vector<32x96xf32>
    %18 = arith.truncf %17 : vector<32x96xf32> to vector<32x96xbf16>
    %c0_6 = arith.constant 0 : index
    %c0_7 = arith.constant 0 : index
    %19 = vector.load %arg2[%c0_6, %c0_7] : memref<96x768xbf16, #tpu.memory_space<vmem>>, vector<96x768xbf16>
    %cst_8 = arith.constant dense<0.000000e+00> : vector<32x768xf32>
    %20 = tpu.matmul %18, %19, %cst_8 {dimension_numbers = #tpu.dot_dimension_numbers<[1], [0], [0], [1], [0, 0, 1, 1], [], []>} : vector<32x96xbf16>, vector<96x768xbf16>, vector<32x768xf32> -> vector<32x768xf32>
    %c0_9 = arith.constant 0 : index
    %c0_10 = arith.constant 0 : index
    %21 = vector.load %arg3[%c0_9, %c0_10] : memref<1x768xf32, #tpu.memory_space<vmem>>, vector<1x768xf32>
    %22 = vector.broadcast %21 : vector<1x768xf32> to vector<32x768xf32>
    %23 = arith.addf %20, %22 : vector<32x768xf32>
    %24 = vector.extract_strided_slice %23 {offsets = [0, 0], sizes = [32, 128], strides = [1, 1]} : vector<32x768xf32> to vector<32x128xf32>
    %25 = vector.extract_strided_slice %23 {offsets = [0, 256], sizes = [32, 128], strides = [1, 1]} : vector<32x768xf32> to vector<32x128xf32>
    %26 = vector.extract_strided_slice %23 {offsets = [0, 512], sizes = [32, 128], strides = [1, 1]} : vector<32x768xf32> to vector<32x128xf32>
    %27 = vector.shape_cast %24 : vector<32x128xf32> to vector<2x16x128xf32>
    %28 = arith.truncf %27 : vector<2x16x128xf32> to vector<2x16x128xbf16>
    %29 = vector.shape_cast %25 : vector<32x128xf32> to vector<2x16x128xf32>
    %30 = arith.truncf %29 : vector<2x16x128xf32> to vector<2x16x128xbf16>
    %31 = vector.shape_cast %26 : vector<32x128xf32> to vector<2x16x128xf32>
    %32 = arith.truncf %31 : vector<2x16x128xf32> to vector<2x16x128xbf16>
    "tpu.trace_start"() <{level = 10 : i32, message = "bqd,bkd->bqk"}> : () -> ()
    %cst_11 = arith.constant dense<0.000000e+00> : vector<2x16x16xf32>
    %33 = tpu.matmul %28, %30, %cst_11 {dimension_numbers = #tpu.dot_dimension_numbers<[2], [2], [1], [1], [0, 0, 0, 1, 1, 1], [0], [0]>} : vector<2x16x128xbf16>, vector<2x16x128xbf16>, vector<2x16x16xf32> -> vector<2x16x16xf32>
    "tpu.trace_stop"() : () -> ()
    %cst_12 = arith.constant dense<0xFF800000> : vector<2x16xf32>
    %34 = vector.multi_reduction <maximumf>, %33, %cst_12 [2] : vector<2x16x16xf32> to vector<2x16xf32>
    %35 = vector.shape_cast %34 : vector<2x16xf32> to vector<2x16x1xf32>
    %36 = vector.broadcast %35 : vector<2x16x1xf32> to vector<2x16x16xf32>
    %37 = arith.subf %33, %36 : vector<2x16x16xf32>
    %38 = math.exp %37 : vector<2x16x16xf32>
    %cst_13 = arith.constant dense<0.000000e+00> : vector<2x16xf32>
    %39 = vector.multi_reduction <add>, %38, %cst_13 [2] : vector<2x16x16xf32> to vector<2x16xf32>
    %40 = vector.shape_cast %39 : vector<2x16xf32> to vector<2x16x1xf32>
    %41 = tpu.reciprocal %40 {approx = true} : vector<2x16x1xf32> -> vector<2x16x1xf32>
    %42 = vector.broadcast %41 : vector<2x16x1xf32> to vector<2x16x16xf32>
    %43 = arith.mulf %38, %42 : vector<2x16x16xf32>
    %44 = arith.truncf %43 : vector<2x16x16xf32> to vector<2x16x16xbf16>
    "tpu.trace_start"() <{level = 10 : i32, message = "bqk,bkd->bqd"}> : () -> ()
    %cst_14 = arith.constant dense<0.000000e+00> : vector<2x16x128xf32>
    %45 = tpu.matmul %44, %32, %cst_14 {dimension_numbers = #tpu.dot_dimension_numbers<[2], [1], [1], [2], [0, 0, 0, 1, 1, 2], [0], [0]>} : vector<2x16x16xbf16>, vector<2x16x128xbf16>, vector<2x16x128xf32> -> vector<2x16x128xf32>
    "tpu.trace_stop"() : () -> ()
    %46 = vector.shape_cast %45 : vector<2x16x128xf32> to vector<32x128xf32>
    %47 = arith.truncf %46 : vector<32x128xf32> to vector<32x128xbf16>
    %48 = vector.extract_strided_slice %23 {offsets = [0, 128], sizes = [32, 128], strides = [1, 1]} : vector<32x768xf32> to vector<32x128xf32>
    %49 = vector.extract_strided_slice %23 {offsets = [0, 384], sizes = [32, 128], strides = [1, 1]} : vector<32x768xf32> to vector<32x128xf32>
    %50 = vector.extract_strided_slice %23 {offsets = [0, 640], sizes = [32, 128], strides = [1, 1]} : vector<32x768xf32> to vector<32x128xf32>
    %51 = vector.shape_cast %48 : vector<32x128xf32> to vector<2x16x128xf32>
    %52 = arith.truncf %51 : vector<2x16x128xf32> to vector<2x16x128xbf16>
    %53 = vector.shape_cast %49 : vector<32x128xf32> to vector<2x16x128xf32>
    %54 = arith.truncf %53 : vector<2x16x128xf32> to vector<2x16x128xbf16>
    %55 = vector.shape_cast %50 : vector<32x128xf32> to vector<2x16x128xf32>
    %56 = arith.truncf %55 : vector<2x16x128xf32> to vector<2x16x128xbf16>
    "tpu.trace_start"() <{level = 10 : i32, message = "bqd,bkd->bqk"}> : () -> ()
    %cst_15 = arith.constant dense<0.000000e+00> : vector<2x16x16xf32>
    %57 = tpu.matmul %52, %54, %cst_15 {dimension_numbers = #tpu.dot_dimension_numbers<[2], [2], [1], [1], [0, 0, 0, 1, 1, 1], [0], [0]>} : vector<2x16x128xbf16>, vector<2x16x128xbf16>, vector<2x16x16xf32> -> vector<2x16x16xf32>
    "tpu.trace_stop"() : () -> ()
    %cst_16 = arith.constant dense<0xFF800000> : vector<2x16xf32>
    %58 = vector.multi_reduction <maximumf>, %57, %cst_16 [2] : vector<2x16x16xf32> to vector<2x16xf32>
    %59 = vector.shape_cast %58 : vector<2x16xf32> to vector<2x16x1xf32>
    %60 = vector.broadcast %59 : vector<2x16x1xf32> to vector<2x16x16xf32>
    %61 = arith.subf %57, %60 : vector<2x16x16xf32>
    %62 = math.exp %61 : vector<2x16x16xf32>
    %cst_17 = arith.constant dense<0.000000e+00> : vector<2x16xf32>
    %63 = vector.multi_reduction <add>, %62, %cst_17 [2] : vector<2x16x16xf32> to vector<2x16xf32>
    %64 = vector.shape_cast %63 : vector<2x16xf32> to vector<2x16x1xf32>
    %65 = tpu.reciprocal %64 {approx = true} : vector<2x16x1xf32> -> vector<2x16x1xf32>
    %66 = vector.broadcast %65 : vector<2x16x1xf32> to vector<2x16x16xf32>
    %67 = arith.mulf %62, %66 : vector<2x16x16xf32>
    %68 = arith.truncf %67 : vector<2x16x16xf32> to vector<2x16x16xbf16>
    "tpu.trace_start"() <{level = 10 : i32, message = "bqk,bkd->bqd"}> : () -> ()
    %cst_18 = arith.constant dense<0.000000e+00> : vector<2x16x128xf32>
    %69 = tpu.matmul %68, %56, %cst_18 {dimension_numbers = #tpu.dot_dimension_numbers<[2], [1], [1], [2], [0, 0, 0, 1, 1, 2], [0], [0]>} : vector<2x16x16xbf16>, vector<2x16x128xbf16>, vector<2x16x128xf32> -> vector<2x16x128xf32>
    "tpu.trace_stop"() : () -> ()
    %70 = vector.shape_cast %69 : vector<2x16x128xf32> to vector<32x128xf32>
    %71 = arith.truncf %70 : vector<32x128xf32> to vector<32x128xbf16>
    %72 = tpu.concatenate %47, %71 in 1 : vector<32x128xbf16>, vector<32x128xbf16> -> vector<32x256xbf16>
    %c0_19 = arith.constant 0 : index
    %c0_20 = arith.constant 0 : index
    %73 = vector.load %arg4[%c0_19, %c0_20] : memref<256x96xbf16, #tpu.memory_space<vmem>>, vector<256x96xbf16>
    %cst_21 = arith.constant dense<0.000000e+00> : vector<32x96xf32>
    %74 = tpu.matmul %72, %73, %cst_21 {dimension_numbers = #tpu.dot_dimension_numbers<[1], [0], [0], [1], [0, 0, 1, 1], [], []>} : vector<32x256xbf16>, vector<256x96xbf16>, vector<32x96xf32> -> vector<32x96xf32>
    %c0_22 = arith.constant 0 : index
    %c0_23 = arith.constant 0 : index
    %75 = vector.load %arg5[%c0_22, %c0_23] : memref<1x96xf32, #tpu.memory_space<vmem>>, vector<1x96xf32>
    %76 = vector.broadcast %75 : vector<1x96xf32> to vector<32x96xf32>
    %77 = arith.addf %74, %76 : vector<32x96xf32>
    %78 = arith.addf %1, %77 : vector<32x96xf32>
    %cst_24 = arith.constant dense<0.000000e+00> : vector<32xf32>
    %79 = vector.multi_reduction <add>, %78, %cst_24 [1] : vector<32x96xf32> to vector<32xf32>
    %80 = vector.shape_cast %79 : vector<32xf32> to vector<32x1xf32>
    %cst_25 = arith.constant 9.600000e+01 : f32
    %81 = vector.broadcast %cst_25 : f32 to vector<32x1xf32>
    %82 = arith.divf %80, %81 : vector<32x1xf32>
    %83 = vector.broadcast %82 : vector<32x1xf32> to vector<32x96xf32>
    %84 = arith.subf %78, %83 : vector<32x96xf32>
    %85 = arith.mulf %84, %84 : vector<32x96xf32>
    %cst_26 = arith.constant dense<0.000000e+00> : vector<32xf32>
    %86 = vector.multi_reduction <add>, %85, %cst_26 [1] : vector<32x96xf32> to vector<32xf32>
    %87 = vector.shape_cast %86 : vector<32xf32> to vector<32x1xf32>
    %cst_27 = arith.constant 9.600000e+01 : f32
    %88 = vector.broadcast %cst_27 : f32 to vector<32x1xf32>
    %89 = arith.divf %87, %88 : vector<32x1xf32>
    %cst_28 = arith.constant 9.99999997E-7 : f32
    %90 = vector.broadcast %cst_28 : f32 to vector<32x1xf32>
    %91 = arith.addf %89, %90 : vector<32x1xf32>
    %92 = math.rsqrt %91 : vector<32x1xf32>
    %93 = vector.broadcast %92 : vector<32x1xf32> to vector<32x96xf32>
    %94 = arith.mulf %84, %93 : vector<32x96xf32>
    %95 = arith.truncf %94 : vector<32x96xf32> to vector<32x96xbf16>
    %c0_29 = arith.constant 0 : index
    %c0_30 = arith.constant 0 : index
    %96 = vector.load %arg6[%c0_29, %c0_30] : memref<96x384xbf16, #tpu.memory_space<vmem>>, vector<96x384xbf16>
    %cst_31 = arith.constant dense<0.000000e+00> : vector<32x384xf32>
    %97 = tpu.matmul %95, %96, %cst_31 {dimension_numbers = #tpu.dot_dimension_numbers<[1], [0], [0], [1], [0, 0, 1, 1], [], []>} : vector<32x96xbf16>, vector<96x384xbf16>, vector<32x384xf32> -> vector<32x384xf32>
    %c0_32 = arith.constant 0 : index
    %c0_33 = arith.constant 0 : index
    %98 = vector.load %arg7[%c0_32, %c0_33] : memref<1x384xf32, #tpu.memory_space<vmem>>, vector<1x384xf32>
    %99 = vector.broadcast %98 : vector<1x384xf32> to vector<32x384xf32>
    %100 = arith.addf %97, %99 : vector<32x384xf32>
    %101 = arith.mulf %100, %100 : vector<32x384xf32>
    %102 = arith.mulf %100, %101 : vector<32x384xf32>
    %cst_34 = arith.constant 4.471500e-02 : f32
    %103 = vector.broadcast %cst_34 : f32 to vector<32x384xf32>
    %104 = arith.mulf %103, %102 : vector<32x384xf32>
    %105 = arith.addf %100, %104 : vector<32x384xf32>
    %cst_35 = arith.constant 0.797884583 : f32
    %106 = vector.broadcast %cst_35 : f32 to vector<32x384xf32>
    %107 = arith.mulf %106, %105 : vector<32x384xf32>
    %108 = math.tanh %107 : vector<32x384xf32>
    %cst_36 = arith.constant 1.000000e+00 : f32
    %109 = vector.broadcast %cst_36 : f32 to vector<32x384xf32>
    %110 = arith.addf %109, %108 : vector<32x384xf32>
    %cst_37 = arith.constant 5.000000e-01 : f32
    %111 = vector.broadcast %cst_37 : f32 to vector<32x384xf32>
    %112 = arith.mulf %111, %110 : vector<32x384xf32>
    %113 = arith.mulf %100, %112 : vector<32x384xf32>
    %114 = arith.truncf %113 : vector<32x384xf32> to vector<32x384xbf16>
    %c0_38 = arith.constant 0 : index
    %c0_39 = arith.constant 0 : index
    %115 = vector.load %arg8[%c0_38, %c0_39] : memref<384x96xbf16, #tpu.memory_space<vmem>>, vector<384x96xbf16>
    %cst_40 = arith.constant dense<0.000000e+00> : vector<32x96xf32>
    %116 = tpu.matmul %114, %115, %cst_40 {dimension_numbers = #tpu.dot_dimension_numbers<[1], [0], [0], [1], [0, 0, 1, 1], [], []>} : vector<32x384xbf16>, vector<384x96xbf16>, vector<32x96xf32> -> vector<32x96xf32>
    %c0_41 = arith.constant 0 : index
    %c0_42 = arith.constant 0 : index
    %117 = vector.load %arg9[%c0_41, %c0_42] : memref<1x96xf32, #tpu.memory_space<vmem>>, vector<1x96xf32>
    %118 = vector.broadcast %117 : vector<1x96xf32> to vector<32x96xf32>
    %119 = arith.addf %116, %118 : vector<32x96xf32>
    %120 = arith.addf %78, %119 : vector<32x96xf32>
    %121 = vector.shape_cast %120 : vector<32x96xf32> to vector<2x16x96xf32>
    %c0_43 = arith.constant 0 : index
    %c0_44 = arith.constant 0 : index
    %c0_45 = arith.constant 0 : index
    %122 = vector.load %arg10[%c0_43, %c0_44, %c0_45] : memref<2x16x96xf32, #tpu.memory_space<vmem>>, vector<2x16x96xf32>
    tpu.vector_store %arg10[%c0_43, %c0_44, %c0_45], %121 {strides = array<i32>} : memref<2x16x96xf32, #tpu.memory_space<vmem>>, vector<2x16x96xf32>,
    return
  }
  func.func @transform_0(%arg0: i32) -> (i32, i32, i32) {
    %c0_i32 = arith.constant 0 : i32
    %c0_i32_0 = arith.constant 0 : i32
    %c0_i32_1 = arith.constant 0 : i32
    return %arg0, %c0_i32, %c0_i32_0 : i32, i32, i32
  }
  func.func @transform_1(%arg0: i32) -> (i32, i32) {
    %c0_i32 = arith.constant 0 : i32
    %c0_i32_0 = arith.constant 0 : i32
    %c0_i32_1 = arith.constant 0 : i32
    return %c0_i32, %c0_i32_0 : i32, i32
  }
  func.func @transform_2(%arg0: i32) -> (i32, i32) {
    %c0_i32 = arith.constant 0 : i32
    %c0_i32_0 = arith.constant 0 : i32
    %c0_i32_1 = arith.constant 0 : i32
    return %c0_i32, %c0_i32_0 : i32, i32
  }
  func.func @transform_3(%arg0: i32) -> (i32, i32) {
    %c0_i32 = arith.constant 0 : i32
    %c0_i32_0 = arith.constant 0 : i32
    %c0_i32_1 = arith.constant 0 : i32
    return %c0_i32, %c0_i32_0 : i32, i32
  }
  func.func @transform_4(%arg0: i32) -> (i32, i32) {
    %c0_i32 = arith.constant 0 : i32
    %c0_i32_0 = arith.constant 0 : i32
    %c0_i32_1 = arith.constant 0 : i32
    return %c0_i32, %c0_i32_0 : i32, i32
  }
  func.func @transform_5(%arg0: i32) -> (i32, i32) {
    %c0_i32 = arith.constant 0 : i32
    %c0_i32_0 = arith.constant 0 : i32
    %c0_i32_1 = arith.constant 0 : i32
    return %c0_i32, %c0_i32_0 : i32, i32
  }
  func.func @transform_6(%arg0: i32) -> (i32, i32) {
    %c0_i32 = arith.constant 0 : i32
    %c0_i32_0 = arith.constant 0 : i32
    %c0_i32_1 = arith.constant 0 : i32
    return %c0_i32, %c0_i32_0 : i32, i32
  }
  func.func @transform_7(%arg0: i32) -> (i32, i32) {
    %c0_i32 = arith.constant 0 : i32
    %c0_i32_0 = arith.constant 0 : i32
    %c0_i32_1 = arith.constant 0 : i32
    return %c0_i32, %c0_i32_0 : i32, i32
  }
  func.func @transform_8(%arg0: i32) -> (i32, i32) {
    %c0_i32 = arith.constant 0 : i32
    %c0_i32_0 = arith.constant 0 : i32
    %c0_i32_1 = arith.constant 0 : i32
    return %c0_i32, %c0_i32_0 : i32, i32
  }
  func.func @transform_9(%arg0: i32) -> (i32, i32, i32) {
    %c0_i32 = arith.constant 0 : i32
    %c0_i32_0 = arith.constant 0 : i32
    %c0_i32_1 = arith.constant 0 : i32
    return %arg0, %c0_i32, %c0_i32_0 : i32, i32, i32
  }
}

</mosaic_0001>

<llo_original>
// kernel: tpu_custom_call.1
$region0: #{tpu_custom_call.1}
  #allocation0 [shape = 'u32[]', space=smem, size = 0x4, offset = 0x4, fixed_abs, tag = 'smem constant byte address 0x4 - core index']
  #allocation1 [shape = 'u32[72,128]{1,0:T(1,128)}', space=vmem, size = 0x9000, scoped, tag = 'internal scratch']
  %s0 = inlined_call_operand.vmem [shape: f32[2,16,96], index: 0, kind: input, shape index: {}]
  %s1 = inlined_call_operand.vmem [shape: bf16[96,768], index: 1, kind: input, shape index: {}]
  %s2 = inlined_call_operand.vmem [shape: f32[1,768], index: 2, kind: input, shape index: {}]
  %s3 = inlined_call_operand.vmem [shape: bf16[256,96], index: 3, kind: input, shape index: {}]
  %s4 = inlined_call_operand.vmem [shape: f32[1,96], index: 4, kind: input, shape index: {}]
  %s5 = inlined_call_operand.hbm [shape: bf16[96,384], index: 5, kind: input, shape index: {}]
  %s6 = inlined_call_operand.vmem [shape: f32[1,384], index: 6, kind: input, shape index: {}]
  %s7 = inlined_call_operand.vmem [shape: bf16[384,96], index: 7, kind: input, shape index: {}]
  %s8 = inlined_call_operand.vmem [shape: f32[1,96], index: 8, kind: input, shape index: {}]
  %s9 = inlined_call_operand.hbm [shape: f32[2,16,96], index: 9, kind: output, shape index: {}]
  %s10 = sld [smem:[#allocation0]]
  $region50: #{tpu_custom_call.1} parent=0
    _
  %s12 = ssub.s32 1, %s10
  %s13 = scalar_select 0, %s12, %s10
  $region1: #{tpu_custom_call.1} parent=0
    #allocation2 [shape = 'u8[73728]{0}', space=vmem, size = 0x12000, scoped, tag = 'input window, operand 5, single buffered']
    #allocation3 [shape = 's32[1]{0}', space=sflag, size = 0x4, scoped, tag = 'scoped memory for tpu_custom_call.1']
    #allocation4 [shape = 's32[1]{0}', space=sflag, size = 0x4, scoped, tag = 'scoped memory for tpu_custom_call.1']
    #allocation5 [shape = 'u8[16384]{0}', space=vmem, size = 0x4000, scoped, tag = 'output window, operand 0, single buffered']
    %14 = vsyncpa [#allocation3], 0
    %15 = vsyncpa [#allocation4], 0
    // Predicated region
    $region2: #{tpu_custom_call.1} parent=1 // pred_check
      _
    $region3: #{tpu_custom_call.1} parent=1 // pred_check_branch
      %17 = sbr.rel (0) target = $region5
    $region4: #{tpu_custom_call.1} parent=1 // pred_region
      _
    $region5: #{tpu_custom_call.1} parent=1 // pred_fallthru
      _
    // Predicated region
    $region6: #{tpu_custom_call.1} parent=1 // pred_check
      _
    $region7: #{tpu_custom_call.1} parent=1 // pred_check_branch
      %19 = sbr.rel (0) target = $region9
    $region8: #{tpu_custom_call.1} parent=1 // pred_region
      _
    $region9: #{tpu_custom_call.1} parent=1 // pred_fallthru
      _
    // Predicated region
    $region10: #{tpu_custom_call.1} parent=1 // pred_check
      _
    $region11: #{tpu_custom_call.1} parent=1 // pred_check_branch
      %21 = sbr.rel (0) target = $region13
    $region12: #{tpu_custom_call.1} parent=1 // pred_region
      _
    $region13: #{tpu_custom_call.1} parent=1 // pred_fallthru
      _
    // Predicated region
    $region14: #{tpu_custom_call.1} parent=1 // pred_check
      _
    $region15: #{tpu_custom_call.1} parent=1 // pred_check_branch
      %23 = sbr.rel (0) target = $region17
    $region16: #{tpu_custom_call.1} parent=1 // pred_region
      _
    $region17: #{tpu_custom_call.1} parent=1 // pred_fallthru
      _
    // Predicated region
    $region18: #{tpu_custom_call.1} parent=1 // pred_check
      _
    $region19: #{tpu_custom_call.1} parent=1 // pred_check_branch
      %25 = sbr.rel (0) target = $region21
    $region20: #{tpu_custom_call.1} parent=1 // pred_region
      _
    $region21: #{tpu_custom_call.1} parent=1 // pred_fallthru
      _
    // Predicated region
    $region22: #{tpu_custom_call.1} parent=1 // pred_check
      _
    $region23: #{tpu_custom_call.1} parent=1 // pred_check_branch
      %27 = sbr.rel (0) target = $region25
    $region24: #{tpu_custom_call.1} parent=1 // pred_region
      %29 = vsyncadd [#allocation3], 0
      %s30 = sshll.u32 %s5, 4
      %s31 = int_to_ptr.hbm [resolvable:$true] %s30
      %s32 = sshll.u32 [#allocation2], 4
      %s33 = int_to_ptr.vmem [resolvable:$true] %s32
      %38 = dma.hbm_to_vmem [thread:$0]  %s31, 2304, %s33, [#allocation3], 192, 192, 12
    $region25: #{tpu_custom_call.1} parent=1 // pred_fallthru
      _
    // Predicated region
    $region26: #{tpu_custom_call.1} parent=1 // pred_check
      _
    $region27: #{tpu_custom_call.1} parent=1 // pred_check_branch
      %40 = sbr.rel (0) target = $region29
    $region28: #{tpu_custom_call.1} parent=1 // pred_region
      _
    $region29: #{tpu_custom_call.1} parent=1 // pred_fallthru
      _
    // Predicated region
    $region30: #{tpu_custom_call.1} parent=1 // pred_check
      _
    $region31: #{tpu_custom_call.1} parent=1 // pred_check_branch
      %42 = sbr.rel (0) target = $region33
    $region32: #{tpu_custom_call.1} parent=1 // pred_region
      _
    $region33: #{tpu_custom_call.1} parent=1 // pred_fallthru
      _
    // Predicated region
    $region34: #{tpu_custom_call.1} parent=1 // pred_check
      _
    $region35: #{tpu_custom_call.1} parent=1 // pred_check_branch
      %44 = sbr.rel (0) target = $region37
    $region36: #{tpu_custom_call.1} parent=1 // pred_region
      _
    $region37: #{tpu_custom_call.1} parent=1 // pred_fallthru
      _
    // Predicated region
    $region38: #{tpu_custom_call.1} parent=1 // pred_check
      _
    $region39: #{tpu_custom_call.1} parent=1 // pred_check_branch
      %46 = sbr.rel (0) target = $region41
    $region40: #{tpu_custom_call.1} parent=1 // pred_region
      %48 = dma.done [#allocation3], 2304
    $region41: #{tpu_custom_call.1} parent=1 // pred_fallthru
      _
    %v50 = vld [vmem:[%s0] sm:$0xff]
    %v51 = vld [vmem:[%s0 + $0x8] sm:$0xff]
    %v52 = vld [vmem:[%s0 + $0x10] sm:$0xff]
    %v53 = vld [vmem:[%s0 + $0x18] sm:$0xff]
    %vm54 = vcmask 785408
    %v55 = vsel %vm54, %v50, 0.0
    %56 = vadd.xlane.f32.xlu0 %v55
    %v57 = vpop.xlane.xlu0 %56
    %v58 = vsel %vm54, %v51, 0.0
    %59 = vadd.xlane.f32.xlu0 %v58
    %v60 = vpop.xlane.xlu0 %59
    %v61 = vsel %vm54, %v52, 0.0
    %62 = vadd.xlane.f32.xlu0 %v61
    %v63 = vpop.xlane.xlu0 %62
    %v64 = vsel %vm54, %v53, 0.0
    %65 = vadd.xlane.f32.xlu0 %v64
    %v66 = vpop.xlane.xlu0 %65
    %v67 = vrcp.pop 96.0
    %v68 = vmul.f32 96.0, %v67
    %v69 = vsub.f32 1.0, %v68
    %v70 = vmul.f32 %v67, %v69
    %v71 = vadd.f32 %v67, %v70
    %vm72 = vweird.f32 %v67
    %v73 = vsel %vm72, %v67, %v71
    %v74 = vmul.f32 %v57, %v73
    %v75 = vmul.f32 %v60, %v73
    %v76 = vmul.f32 %v63, %v73
    %v77 = vmul.f32 %v66, %v73
    %v78 = vsub.f32 %v50, %v74
    %v79 = vsub.f32 %v51, %v75
    %v80 = vsub.f32 %v52, %v76
    %v81 = vsub.f32 %v53, %v77
    %v82 = vmul.f32 %v78, %v78
    %v83 = vmul.f32 %v79, %v79
    %v84 = vmul.f32 %v80, %v80
    %v85 = vmul.f32 %v81, %v81
    %v86 = vsel %vm54, %v82, 0.0
    %87 = vadd.xlane.f32.xlu0 %v86
    %v88 = vpop.xlane.xlu0 %87
    %v89 = vsel %vm54, %v83, 0.0
    %90 = vadd.xlane.f32.xlu0 %v89
    %v91 = vpop.xlane.xlu0 %90
    %v92 = vsel %vm54, %v84, 0.0
    %93 = vadd.xlane.f32.xlu0 %v92
    %v94 = vpop.xlane.xlu0 %93
    %v95 = vsel %vm54, %v85, 0.0
    %96 = vadd.xlane.f32.xlu0 %v95
    %v97 = vpop.xlane.xlu0 %96
    %v98 = vmul.f32 %v88, %v73
    %v99 = vmul.f32 %v91, %v73
    %v100 = vmul.f32 %v94, %v73
    %v101 = vmul.f32 %v97, %v73
    %v102 = vadd.f32 %v98, 1e-06
    %v103 = vadd.f32 %v99, 1e-06
    %v104 = vadd.f32 %v100, 1e-06
    %v105 = vadd.f32 %v101, 1e-06
    %v106 = vrsqrt.pop %v102
    %v107 = vmul.f32 %v106, %v102
    %v108 = vmul.f32 %v107, %v106
    %v109 = vmul.f32 0.5, %v108
    %v110 = vsub.f32 1.5, %v109
    %v111 = vmul.f32 %v106, %v110
    %vm112 = vweird.f32 %v102
    %vm113 = vweird.f32 %v106
    %vm114 = vmor %vm112, %vm113
    %v115 = vsel %vm114, %v106, %v111
    %v116 = vrsqrt.pop %v103
    %v117 = vmul.f32 %v116, %v103
    %v118 = vmul.f32 %v117, %v116
    %v119 = vmul.f32 0.5, %v118
    %v120 = vsub.f32 1.5, %v119
    %v121 = vmul.f32 %v116, %v120
    %vm122 = vweird.f32 %v103
    %vm123 = vweird.f32 %v116
    %vm124 = vmor %vm122, %vm123
    %v125 = vsel %vm124, %v116, %v121
    %v126 = vrsqrt.pop %v104
    %v127 = vmul.f32 %v126, %v104
    %v128 = vmul.f32 %v127, %v126
    %v129 = vmul.f32 0.5, %v128
    %v130 = vsub.f32 1.5, %v129
    %v131 = vmul.f32 %v126, %v130
    %vm132 = vweird.f32 %v104
    %vm133 = vweird.f32 %v126
    %vm134 = vmor %vm132, %vm133
    %v135 = vsel %vm134, %v126, %v131
    %v136 = vrsqrt.pop %v105
    %v137 = vmul.f32 %v136, %v105
    %v138 = vmul.f32 %v137, %v136
    %v139 = vmul.f32 0.5, %v138
    %v140 = vsub.f32 1.5, %v139
    %v141 = vmul.f32 %v136, %v140
    %vm142 = vweird.f32 %v105
    %vm143 = vweird.f32 %v136
    %vm144 = vmor %vm142, %vm143
    %v145 = vsel %vm144, %v136, %v141
    %v146 = vmul.f32 %v78, %v115
    %v147 = vmul.f32 %v79, %v125
    %v148 = vmul.f32 %v80, %v135
    %v149 = vmul.f32 %v81, %v145
    %v150 = vpack.c.bf16 %v147, %v146
    %v151 = vpack.c.bf16 %v149, %v148
    %v152 = vld [vmem:[%s1] sm:$0xff]
    %v153 = vld [vmem:[%s1 + $0x8] sm:$0xff]
    %v154 = vld [vmem:[%s1 + $0x10] sm:$0xff]
    %v155 = vld [vmem:[%s1 + $0x18] sm:$0xff]
    %v156 = vld [vmem:[%s1 + $0x20] sm:$0xff]
    %v157 = vld [vmem:[%s1 + $0x28] sm:$0xff]
    %v158 = vld [vmem:[%s1 + $0x30] sm:$0xff]
    %v159 = vld [vmem:[%s1 + $0x38] sm:$0xff]
    %v160 = vld [vmem:[%s1 + $0x40] sm:$0xff]
    %v161 = vld [vmem:[%s1 + $0x48] sm:$0xff]
    %v162 = vld [vmem:[%s1 + $0x50] sm:$0xff]
    %v163 = vld [vmem:[%s1 + $0x58] sm:$0xff]
    %v164 = vld [vmem:[%s1 + $0x60] sm:$0xff]
    %v165 = vld [vmem:[%s1 + $0x68] sm:$0xff]
    %v166 = vld [vmem:[%s1 + $0x70] sm:$0xff]
    %v167 = vld [vmem:[%s1 + $0x78] sm:$0xff]
    %v168 = vld [vmem:[%s1 + $0x80] sm:$0xff]
    %v169 = vld [vmem:[%s1 + $0x88] sm:$0xff]
    %v170 = vld [vmem:[%s1 + $0x90] sm:$0xff]
    %v171 = vld [vmem:[%s1 + $0x98] sm:$0xff]
    %v172 = vld [vmem:[%s1 + $0xa0] sm:$0xff]
    %v173 = vld [vmem:[%s1 + $0xa8] sm:$0xff]
    %v174 = vld [vmem:[%s1 + $0xb0] sm:$0xff]
    %v175 = vld [vmem:[%s1 + $0xb8] sm:$0xff]
    %v176 = vld [vmem:[%s1 + $0xc0] sm:$0xff]
    %v177 = vld [vmem:[%s1 + $0xc8] sm:$0xff]
    %v178 = vld [vmem:[%s1 + $0xd0] sm:$0xff]
    %v179 = vld [vmem:[%s1 + $0xd8] sm:$0xff]
    %v180 = vld [vmem:[%s1 + $0xe0] sm:$0xff]
    %v181 = vld [vmem:[%s1 + $0xe8] sm:$0xff]
    %v182 = vld [vmem:[%s1 + $0xf0] sm:$0xff]
    %v183 = vld [vmem:[%s1 + $0xf8] sm:$0xff]
    %v184 = vld [vmem:[%s1 + $0x100] sm:$0xff]
    %v185 = vld [vmem:[%s1 + $0x108] sm:$0xff]
    %v186 = vld [vmem:[%s1 + $0x110] sm:$0xff]
    %v187 = vld [vmem:[%s1 + $0x118] sm:$0xff]
    %v188 = vld [vmem:[%s2] sm:$0x3f]
    %v190 = vperm.slane %v188, 0
    %v191 = vperm.slane %v188, 1
    %v192 = vperm.slane %v188, 2
    %v193 = vperm.slane %v188, 3
    %v194 = vperm.slane %v188, 4
    %v195 = vperm.slane %v188, 5
    %v238 = vunpack.c.l.b16 %v152
    %v239 = vunpack.c.h.b16 %v152
    %v240 = vunpack.c.l.b16 %v153
    %v241 = vunpack.c.h.b16 %v153
    %v242 = vunpack.c.l.b16 %v154
    %v243 = vunpack.c.h.b16 %v154
    %v244 = vunpack.c.l.b16 %v155
    %v245 = vunpack.c.h.b16 %v155
    %v246 = vunpack.c.l.b16 %v156
    %v247 = vunpack.c.h.b16 %v156
    %v248 = vunpack.c.l.b16 %v157
    %v249 = vunpack.c.h.b16 %v157
    %v250 = vunpack.c.l.b16 %v158
    %v251 = vunpack.c.h.b16 %v158
    %v252 = vunpack.c.l.b16 %v159
    %v253 = vunpack.c.h.b16 %v159
    %v254 = vunpack.c.l.b16 %v160
    %v255 = vunpack.c.h.b16 %v160
    %v256 = vunpack.c.l.b16 %v161
    %v257 = vunpack.c.h.b16 %v161
    %v258 = vunpack.c.l.b16 %v162
    %v259 = vunpack.c.h.b16 %v162
    %v260 = vunpack.c.l.b16 %v163
    %v261 = vunpack.c.h.b16 %v163
    %v262 = vunpack.c.l.b16 %v164
    %v263 = vunpack.c.h.b16 %v164
    %v264 = vunpack.c.l.b16 %v165
    %v265 = vunpack.c.h.b16 %v165
    %v266 = vunpack.c.l.b16 %v166
    %v267 = vunpack.c.h.b16 %v166
    %v268 = vunpack.c.l.b16 %v167
    %v269 = vunpack.c.h.b16 %v167
    %v270 = vunpack.c.l.b16 %v168
    %v271 = vunpack.c.h.b16 %v168
    %v272 = vunpack.c.l.b16 %v169
    %v273 = vunpack.c.h.b16 %v169
    %v274 = vunpack.c.l.b16 %v170
    %v275 = vunpack.c.h.b16 %v170
    %v276 = vunpack.c.l.b16 %v171
    %v277 = vunpack.c.h.b16 %v171
    %v278 = vunpack.c.l.b16 %v172
    %v279 = vunpack.c.h.b16 %v172
    %v280 = vunpack.c.l.b16 %v173
    %v281 = vunpack.c.h.b16 %v173
    %v282 = vunpack.c.l.b16 %v174
    %v283 = vunpack.c.h.b16 %v174
    %v284 = vunpack.c.l.b16 %v175
    %v285 = vunpack.c.h.b16 %v175
    %v286 = vunpack.c.l.b16 %v176
    %v287 = vunpack.c.h.b16 %v176
    %v288 = vunpack.c.l.b16 %v177
    %v289 = vunpack.c.h.b16 %v177
    %v290 = vunpack.c.l.b16 %v178
    %v291 = vunpack.c.h.b16 %v178
    %v292 = vunpack.c.l.b16 %v179
    %v293 = vunpack.c.h.b16 %v179
    %v294 = vunpack.c.l.b16 %v180
    %v295 = vunpack.c.h.b16 %v180
    %v296 = vunpack.c.l.b16 %v181
    %v297 = vunpack.c.h.b16 %v181
    %v298 = vunpack.c.l.b16 %v182
    %v299 = vunpack.c.h.b16 %v182
    %v300 = vunpack.c.l.b16 %v183
    %v301 = vunpack.c.h.b16 %v183
    %v302 = vunpack.c.l.b16 %v184
    %v303 = vunpack.c.h.b16 %v184
    %v304 = vunpack.c.l.b16 %v185
    %v305 = vunpack.c.h.b16 %v185
    %v306 = vunpack.c.l.b16 %v186
    %v307 = vunpack.c.h.b16 %v186
    %v308 = vunpack.c.l.b16 %v187
    %v309 = vunpack.c.h.b16 %v187
    %v310 = vpack.c.b16 %v244, %v238
    %v311 = vpack.c.b16 %v245, %v239
    %v312 = vpack.c.b16 %v246, %v240
    %v313 = vpack.c.b16 %v247, %v241
    %v314 = vpack.c.b16 %v248, %v242
    %v315 = vpack.c.b16 %v249, %v243
    %v316 = vpack.c.b16 %v256, %v250
    %v317 = vpack.c.b16 %v257, %v251
    %v318 = vpack.c.b16 %v258, %v252
    %v319 = vpack.c.b16 %v259, %v253
    %v320 = vpack.c.b16 %v260, %v254
    %v321 = vpack.c.b16 %v261, %v255
    %v322 = vpack.c.b16 %v268, %v262
    %v323 = vpack.c.b16 %v269, %v263
    %v324 = vpack.c.b16 %v270, %v264
    %v325 = vpack.c.b16 %v271, %v265
    %v326 = vpack.c.b16 %v272, %v266
    %v327 = vpack.c.b16 %v273, %v267
    %v328 = vpack.c.b16 %v280, %v274
    %v329 = vpack.c.b16 %v281, %v275
    %v330 = vpack.c.b16 %v282, %v276
    %v331 = vpack.c.b16 %v283, %v277
    %v332 = vpack.c.b16 %v284, %v278
    %v333 = vpack.c.b16 %v285, %v279
    %v334 = vpack.c.b16 %v292, %v286
    %v335 = vpack.c.b16 %v293, %v287
    %v336 = vpack.c.b16 %v294, %v288
    %v337 = vpack.c.b16 %v295, %v289
    %v338 = vpack.c.b16 %v296, %v290
    %v339 = vpack.c.b16 %v297, %v291
    %v340 = vpack.c.b16 %v304, %v298
    %v341 = vpack.c.b16 %v305, %v299
    %v342 = vpack.c.b16 %v306, %v300
    %v343 = vpack.c.b16 %v307, %v301
    %v344 = vpack.c.b16 %v308, %v302
    %v345 = vpack.c.b16 %v309, %v303
    %v383 = vsel %vm54, %v150, 0
    %v386 = vsel %vm54, %v151, 0
    %388 = vmatpush.bf16.msra.mxu0 0
    %389 = vmatpush.bf16.msra.mxu0 0
    %390 = vmatpush.bf16.msra.mxu0 %v340
    %391 = vmatpush.bf16.msra.mxu0 %v334
    %392 = vmatpush.bf16.msra.mxu0 %v328
    %393 = vmatpush.bf16.msra.mxu0 %v322
    %394 = vmatpush.bf16.msra.mxu0 %v316
    %395 = vmatpush.bf16.msra.mxu0 %v310
    %396 = vmatmul.bf16.gmra.mxu0 %v383
    %v397 = vpop.f32.mrf.mxu0
    %v398 = vadd.f32 %v190, %v397
    %v399 = vpop.f32.mrf.mxu0
    %v400 = vadd.f32 %v190, %v399
    %401 = vmatmul.bf16.gmra.mxu0 %v386
    %v402 = vpop.f32.mrf.mxu0
    %v403 = vadd.f32 %v190, %v402
    %v404 = vpop.f32.mrf.mxu0
    %v405 = vadd.f32 %v190, %v404
    %406 = vdwg.mxu0
    %407 = vmatpush.bf16.msra.mxu0 0
    %408 = vmatpush.bf16.msra.mxu0 0
    %409 = vmatpush.bf16.msra.mxu0 %v341
    %410 = vmatpush.bf16.msra.mxu0 %v335
    %411 = vmatpush.bf16.msra.mxu0 %v329
    %412 = vmatpush.bf16.msra.mxu0 %v323
    %413 = vmatpush.bf16.msra.mxu0 %v317
    %414 = vmatpush.bf16.msra.mxu0 %v311
    %415 = vmatmul.bf16.gmra.mxu0 %v383
    %v416 = vpop.f32.mrf.mxu0
    %v417 = vadd.f32 %v191, %v416
    %v418 = vpop.f32.mrf.mxu0
    %v419 = vadd.f32 %v191, %v418
    %420 = vmatmul.bf16.gmra.mxu0 %v386
    %v421 = vpop.f32.mrf.mxu0
    %v422 = vadd.f32 %v191, %v421
    %v423 = vpop.f32.mrf.mxu0
    %v424 = vadd.f32 %v191, %v423
    %425 = vdwg.mxu0
    %426 = vmatpush.bf16.msra.mxu0 0
    %427 = vmatpush.bf16.msra.mxu0 0
    %428 = vmatpush.bf16.msra.mxu0 %v342
    %429 = vmatpush.bf16.msra.mxu0 %v336
    %430 = vmatpush.bf16.msra.mxu0 %v330
    %431 = vmatpush.bf16.msra.mxu0 %v324
    %432 = vmatpush.bf16.msra.mxu0 %v318
    %433 = vmatpush.bf16.msra.mxu0 %v312
    %434 = vmatmul.bf16.gmra.mxu0 %v383
    %v435 = vpop.f32.mrf.mxu0
    %v436 = vadd.f32 %v192, %v435
    %v437 = vpop.f32.mrf.mxu0
    %v438 = vadd.f32 %v192, %v437
    %439 = vmatmul.bf16.gmra.mxu0 %v386
    %v440 = vpop.f32.mrf.mxu0
    %v441 = vadd.f32 %v192, %v440
    %v442 = vpop.f32.mrf.mxu0
    %v443 = vadd.f32 %v192, %v442
    %444 = vdwg.mxu0
    %445 = vmatpush.bf16.msra.mxu0 0
    %446 = vmatpush.bf16.msra.mxu0 0
    %447 = vmatpush.bf16.msra.mxu0 %v343
    %448 = vmatpush.bf16.msra.mxu0 %v337
    %449 = vmatpush.bf16.msra.mxu0 %v331
    %450 = vmatpush.bf16.msra.mxu0 %v325
    %451 = vmatpush.bf16.msra.mxu0 %v319
    %452 = vmatpush.bf16.msra.mxu0 %v313
    %453 = vmatmul.bf16.gmra.mxu0 %v383
    %v454 = vpop.f32.mrf.mxu0
    %v455 = vadd.f32 %v193, %v454
    %v456 = vpop.f32.mrf.mxu0
    %v457 = vadd.f32 %v193, %v456
    %458 = vmatmul.bf16.gmra.mxu0 %v386
    %v459 = vpop.f32.mrf.mxu0
    %v460 = vadd.f32 %v193, %v459
    %v461 = vpop.f32.mrf.mxu0
    %v462 = vadd.f32 %v193, %v461
    %463 = vdwg.mxu0
    %464 = vmatpush.bf16.msra.mxu0 0
    %465 = vmatpush.bf16.msra.mxu0 0
    %466 = vmatpush.bf16.msra.mxu0 %v344
    %467 = vmatpush.bf16.msra.mxu0 %v338
    %468 = vmatpush.bf16.msra.mxu0 %v332
    %469 = vmatpush.bf16.msra.mxu0 %v326
    %470 = vmatpush.bf16.msra.mxu0 %v320
    %471 = vmatpush.bf16.msra.mxu0 %v314
    %472 = vmatmul.bf16.gmra.mxu0 %v383
    %v473 = vpop.f32.mrf.mxu0
    %v474 = vadd.f32 %v194, %v473
    %v475 = vpop.f32.mrf.mxu0
    %v476 = vadd.f32 %v194, %v475
    %477 = vmatmul.bf16.gmra.mxu0 %v386
    %v478 = vpop.f32.mrf.mxu0
    %v479 = vadd.f32 %v194, %v478
    %v480 = vpop.f32.mrf.mxu0
    %v481 = vadd.f32 %v194, %v480
    %482 = vdwg.mxu0
    %483 = vmatpush.bf16.msra.mxu0 0
    %484 = vmatpush.bf16.msra.mxu0 0
    %485 = vmatpush.bf16.msra.mxu0 %v345
    %486 = vmatpush.bf16.msra.mxu0 %v339
    %487 = vmatpush.bf16.msra.mxu0 %v333
    %488 = vmatpush.bf16.msra.mxu0 %v327
    %489 = vmatpush.bf16.msra.mxu0 %v321
    %490 = vmatpush.bf16.msra.mxu0 %v315
    %491 = vmatmul.bf16.gmra.mxu0 %v383
    %v492 = vpop.f32.mrf.mxu0
    %v493 = vadd.f32 %v195, %v492
    %v494 = vpop.f32.mrf.mxu0
    %v495 = vadd.f32 %v195, %v494
    %496 = vmatmul.bf16.gmra.mxu0 %v386
    %v497 = vpop.f32.mrf.mxu0
    %v498 = vadd.f32 %v195, %v497
    %v499 = vpop.f32.mrf.mxu0
    %v500 = vadd.f32 %v195, %v499
    %501 = vdwg.mxu0
    %v502 = vpack.c.bf16 %v398, %v398
    %v503 = vpack.c.bf16 %v400, %v400
    %v504 = vpack.c.bf16 %v403, %v403
    %v505 = vpack.c.bf16 %v405, %v405
    %v506 = vpack.c.bf16 %v436, %v436
    %v507 = vpack.c.bf16 %v438, %v438
    %v508 = vpack.c.bf16 %v441, %v441
    %v509 = vpack.c.bf16 %v443, %v443
    %v510 = vpack.c.bf16 %v474, %v474
    %v511 = vpack.c.bf16 %v476, %v476
    %v512 = vpack.c.bf16 %v479, %v479
    %v513 = vpack.c.bf16 %v481, %v481
    %v516 = vunpack.c.l.b16 %v502
    %v517 = vunpack.c.l.b16 %v503
    %v518 = vpack.c.b16 %v517, %v516
    %v522 = vunpack.c.l.b16 %v506
    %v523 = vunpack.c.l.b16 %v507
    %v524 = vpack.c.b16 %v523, %v522
    %526 = vmatpush.bf16.xpose.msra.mxu0 0
    %527 = vmatpush.bf16.xpose.msra.mxu0 0
    %528 = vmatpush.bf16.xpose.msra.mxu0 0
    %529 = vmatpush.bf16.xpose.msra.mxu0 0
    %530 = vmatpush.bf16.xpose.msra.mxu0 0
    %531 = vmatpush.bf16.xpose.msra.mxu0 0
    %532 = vmatpush.bf16.xpose.msra.mxu0 0
    %533 = vmatpush.bf16.xpose.msra.mxu0 %v524
    %534 = vmatmul.bf16.gmra.mxu0 %v518
    %v535 = vpop.f32.mrf.mxu0
    %v536 = vadd.f32 0.0, %v535
    %v537 = vpop.f32.mrf.mxu0
    %v538 = vadd.f32 0.0, %v537
    %539 = vdwg.mxu0
    %v542 = vunpack.c.l.b16 %v504
    %v543 = vunpack.c.l.b16 %v505
    %v544 = vpack.c.b16 %v543, %v542
    %v548 = vunpack.c.l.b16 %v508
    %v549 = vunpack.c.l.b16 %v509
    %v550 = vpack.c.b16 %v549, %v548
    %552 = vmatpush.bf16.xpose.msra.mxu0 0
    %553 = vmatpush.bf16.xpose.msra.mxu0 0
    %554 = vmatpush.bf16.xpose.msra.mxu0 0
    %555 = vmatpush.bf16.xpose.msra.mxu0 0
    %556 = vmatpush.bf16.xpose.msra.mxu0 0
    %557 = vmatpush.bf16.xpose.msra.mxu0 0
    %558 = vmatpush.bf16.xpose.msra.mxu0 0
    %559 = vmatpush.bf16.xpose.msra.mxu0 %v550
    %560 = vmatmul.bf16.gmra.mxu0 %v544
    %v561 = vpop.f32.mrf.mxu0
    %v562 = vadd.f32 0.0, %v561
    %v563 = vpop.f32.mrf.mxu0
    %v564 = vadd.f32 0.0, %v563
    %565 = vdwg.mxu0
    %vm566 = vcmask 130048
    %v567 = vsel %vm566, %v536, -inf
    %568 = vmax.xlane.f32.xlu0 %v567
    %v569 = vpop.xlane.xlu0 %568
    %v570 = vsel %vm566, %v538, -inf
    %571 = vmax.xlane.f32.xlu0 %v570
    %v572 = vpop.xlane.xlu0 %571
    %v573 = vsel %vm566, %v562, -inf
    %574 = vmax.xlane.f32.xlu0 %v573
    %v575 = vpop.xlane.xlu0 %574
    %v576 = vsel %vm566, %v564, -inf
    %577 = vmax.xlane.f32.xlu0 %v576
    %v578 = vpop.xlane.xlu0 %577
    %v579 = vsub.f32 %v536, %v569
    %v580 = vsub.f32 %v538, %v572
    %v581 = vsub.f32 %v562, %v575
    %v582 = vsub.f32 %v564, %v578
    %v583 = vmul.f32 %v579, 1.442695
    %v584 = vpow.pop %v583
    %v585 = vmul.f32 %v580, 1.442695
    %v586 = vpow.pop %v585
    %v587 = vmul.f32 %v581, 1.442695
    %v588 = vpow.pop %v587
    %v589 = vmul.f32 %v582, 1.442695
    %v590 = vpow.pop %v589
    %v591 = vsel %vm566, %v584, 0.0
    %592 = vadd.xlane.f32.xlu0 %v591
    %v593 = vpop.xlane.xlu0 %592
    %v594 = vsel %vm566, %v586, 0.0
    %595 = vadd.xlane.f32.xlu0 %v594
    %v596 = vpop.xlane.xlu0 %595
    %v597 = vsel %vm566, %v588, 0.0
    %598 = vadd.xlane.f32.xlu0 %v597
    %v599 = vpop.xlane.xlu0 %598
    %v600 = vsel %vm566, %v590, 0.0
    %601 = vadd.xlane.f32.xlu0 %v600
    %v602 = vpop.xlane.xlu0 %601
    %v603 = vrcp.pop %v593
    %v604 = vrcp.pop %v596
    %v605 = vrcp.pop %v599
    %v606 = vrcp.pop %v602
    %v607 = vmul.f32 %v584, %v603
    %v608 = vmul.f32 %v586, %v604
    %v609 = vmul.f32 %v588, %v605
    %v610 = vmul.f32 %v590, %v606
    %v611 = vpack.c.bf16 %v607, %v607
    %v612 = vpack.c.bf16 %v608, %v608
    %v613 = vpack.c.bf16 %v609, %v609
    %v614 = vpack.c.bf16 %v610, %v610
    %v617 = vunpack.c.l.b16 %v611
    %v618 = vunpack.c.l.b16 %v612
    %v619 = vpack.c.b16 %v618, %v617
    %v622 = vunpack.c.l.b16 %v510
    %v623 = vunpack.c.l.b16 %v511
    %v624 = vpack.c.b16 %v623, %v622
    %v627 = vsel %vm566, %v619, 0
    %629 = vmatpush.bf16.msra.mxu0 0
    %630 = vmatpush.bf16.msra.mxu0 0
    %631 = vmatpush.bf16.msra.mxu0 0
    %632 = vmatpush.bf16.msra.mxu0 0
    %633 = vmatpush.bf16.msra.mxu0 0
    %634 = vmatpush.bf16.msra.mxu0 0
    %635 = vmatpush.bf16.msra.mxu0 0
    %636 = vmatpush.bf16.msra.mxu0 %v624
    %637 = vmatmul.bf16.gmra.mxu0 %v627
    %v638 = vpop.f32.mrf.mxu0
    %v639 = vadd.f32 0.0, %v638
    %v640 = vpop.f32.mrf.mxu0
    %v641 = vadd.f32 0.0, %v640
    %642 = vdwg.mxu0
    %v645 = vunpack.c.l.b16 %v613
    %v646 = vunpack.c.l.b16 %v614
    %v647 = vpack.c.b16 %v646, %v645
    %v650 = vunpack.c.l.b16 %v512
    %v651 = vunpack.c.l.b16 %v513
    %v652 = vpack.c.b16 %v651, %v650
    %v655 = vsel %vm566, %v647, 0
    %657 = vmatpush.bf16.msra.mxu0 0
    %658 = vmatpush.bf16.msra.mxu0 0
    %659 = vmatpush.bf16.msra.mxu0 0
    %660 = vmatpush.bf16.msra.mxu0 0
    %661 = vmatpush.bf16.msra.mxu0 0
    %662 = vmatpush.bf16.msra.mxu0 0
    %663 = vmatpush.bf16.msra.mxu0 0
    %664 = vmatpush.bf16.msra.mxu0 %v652
    %665 = vmatmul.bf16.gmra.mxu0 %v655
    %v666 = vpop.f32.mrf.mxu0
    %v667 = vadd.f32 0.0, %v666
    %v668 = vpop.f32.mrf.mxu0
    %v669 = vadd.f32 0.0, %v668
    %670 = vdwg.mxu0
    %v671 = vpack.c.bf16 %v639, %v639
    %v672 = vpack.c.bf16 %v641, %v641
    %v673 = vpack.c.bf16 %v667, %v667
    %v674 = vpack.c.bf16 %v669, %v669
    %v675 = vpack.c.bf16 %v417, %v417
    %v676 = vpack.c.bf16 %v419, %v419
    %v677 = vpack.c.bf16 %v422, %v422
    %v678 = vpack.c.bf16 %v424, %v424
    %v679 = vpack.c.bf16 %v455, %v455
    %v680 = vpack.c.bf16 %v457, %v457
    %v681 = vpack.c.bf16 %v460, %v460
    %v682 = vpack.c.bf16 %v462, %v462
    %v683 = vpack.c.bf16 %v493, %v493
    %v684 = vpack.c.bf16 %v495, %v495
    %v685 = vpack.c.bf16 %v498, %v498
    %v686 = vpack.c.bf16 %v500, %v500
    %v689 = vunpack.c.l.b16 %v675
    %v690 = vunpack.c.l.b16 %v676
    %v691 = vpack.c.b16 %v690, %v689
    %v695 = vunpack.c.l.b16 %v679
    %v696 = vunpack.c.l.b16 %v680
    %v697 = vpack.c.b16 %v696, %v695
    %699 = vmatpush.bf16.xpose.msra.mxu0 0
    %700 = vmatpush.bf16.xpose.msra.mxu0 0
    %701 = vmatpush.bf16.xpose.msra.mxu0 0
    %702 = vmatpush.bf16.xpose.msra.mxu0 0
    %703 = vmatpush.bf16.xpose.msra.mxu0 0
    %704 = vmatpush.bf16.xpose.msra.mxu0 0
    %705 = vmatpush.bf16.xpose.msra.mxu0 0
    %706 = vmatpush.bf16.xpose.msra.mxu0 %v697
    %707 = vmatmul.bf16.gmra.mxu0 %v691
    %v708 = vpop.f32.mrf.mxu0
    %v709 = vadd.f32 0.0, %v708
    %v710 = vpop.f32.mrf.mxu0
    %v711 = vadd.f32 0.0, %v710
    %712 = vdwg.mxu0
    %v715 = vunpack.c.l.b16 %v677
    %v716 = vunpack.c.l.b16 %v678
    %v717 = vpack.c.b16 %v716, %v715
    %v721 = vunpack.c.l.b16 %v681
    %v722 = vunpack.c.l.b16 %v682
    %v723 = vpack.c.b16 %v722, %v721
    %725 = vmatpush.bf16.xpose.msra.mxu0 0
    %726 = vmatpush.bf16.xpose.msra.mxu0 0
    %727 = vmatpush.bf16.xpose.msra.mxu0 0
    %728 = vmatpush.bf16.xpose.msra.mxu0 0
    %729 = vmatpush.bf16.xpose.msra.mxu0 0
    %730 = vmatpush.bf16.xpose.msra.mxu0 0
    %731 = vmatpush.bf16.xpose.msra.mxu0 0
    %732 = vmatpush.bf16.xpose.msra.mxu0 %v723
    %733 = vmatmul.bf16.gmra.mxu0 %v717
    %v734 = vpop.f32.mrf.mxu0
    %v735 = vadd.f32 0.0, %v734
    %v736 = vpop.f32.mrf.mxu0
    %v737 = vadd.f32 0.0, %v736
    %738 = vdwg.mxu0
    %v739 = vsel %vm566, %v709, -inf
    %740 = vmax.xlane.f32.xlu0 %v739
    %v741 = vpop.xlane.xlu0 %740
    %v742 = vsel %vm566, %v711, -inf
    %743 = vmax.xlane.f32.xlu0 %v742
    %v744 = vpop.xlane.xlu0 %743
    %v745 = vsel %vm566, %v735, -inf
    %746 = vmax.xlane.f32.xlu0 %v745
    %v747 = vpop.xlane.xlu0 %746
    %v748 = vsel %vm566, %v737, -inf
    %749 = vmax.xlane.f32.xlu0 %v748
    %v750 = vpop.xlane.xlu0 %749
    %v751 = vsub.f32 %v709, %v741
    %v752 = vsub.f32 %v711, %v744
    %v753 = vsub.f32 %v735, %v747
    %v754 = vsub.f32 %v737, %v750
    %v755 = vmul.f32 %v751, 1.442695
    %v756 = vpow.pop %v755
    %v757 = vmul.f32 %v752, 1.442695
    %v758 = vpow.pop %v757
    %v759 = vmul.f32 %v753, 1.442695
    %v760 = vpow.pop %v759
    %v761 = vmul.f32 %v754, 1.442695
    %v762 = vpow.pop %v761
    %v763 = vsel %vm566, %v756, 0.0
    %764 = vadd.xlane.f32.xlu0 %v763
    %v765 = vpop.xlane.xlu0 %764
    %v766 = vsel %vm566, %v758, 0.0
    %767 = vadd.xlane.f32.xlu0 %v766
    %v768 = vpop.xlane.xlu0 %767
    %v769 = vsel %vm566, %v760, 0.0
    %770 = vadd.xlane.f32.xlu0 %v769
    %v771 = vpop.xlane.xlu0 %770
    %v772 = vsel %vm566, %v762, 0.0
    %773 = vadd.xlane.f32.xlu0 %v772
    %v774 = vpop.xlane.xlu0 %773
    %v775 = vrcp.pop %v765
    %v776 = vrcp.pop %v768
    %v777 = vrcp.pop %v771
    %v778 = vrcp.pop %v774
    %v779 = vmul.f32 %v756, %v775
    %v780 = vmul.f32 %v758, %v776
    %v781 = vmul.f32 %v760, %v777
    %v782 = vmul.f32 %v762, %v778
    %v783 = vpack.c.bf16 %v779, %v779
    %v784 = vpack.c.bf16 %v780, %v780
    %v785 = vpack.c.bf16 %v781, %v781
    %v786 = vpack.c.bf16 %v782, %v782
    %v789 = vunpack.c.l.b16 %v783
    %v790 = vunpack.c.l.b16 %v784
    %v791 = vpack.c.b16 %v790, %v789
    %v794 = vunpack.c.l.b16 %v683
    %v795 = vunpack.c.l.b16 %v684
    %v796 = vpack.c.b16 %v795, %v794
    %v799 = vsel %vm566, %v791, 0
    %801 = vmatpush.bf16.msra.mxu0 0
    %802 = vmatpush.bf16.msra.mxu0 0
    %803 = vmatpush.bf16.msra.mxu0 0
    %804 = vmatpush.bf16.msra.mxu0 0
    %805 = vmatpush.bf16.msra.mxu0 0
    %806 = vmatpush.bf16.msra.mxu0 0
    %807 = vmatpush.bf16.msra.mxu0 0
    %808 = vmatpush.bf16.msra.mxu0 %v796
    %809 = vmatmul.bf16.gmra.mxu0 %v799
    %v810 = vpop.f32.mrf.mxu0
    %v811 = vadd.f32 0.0, %v810
    %v812 = vpop.f32.mrf.mxu0
    %v813 = vadd.f32 0.0, %v812
    %814 = vdwg.mxu0
    %v817 = vunpack.c.l.b16 %v785
    %v818 = vunpack.c.l.b16 %v786
    %v819 = vpack.c.b16 %v818, %v817
    %v822 = vunpack.c.l.b16 %v685
    %v823 = vunpack.c.l.b16 %v686
    %v824 = vpack.c.b16 %v823, %v822
    %v827 = vsel %vm566, %v819, 0
    %829 = vmatpush.bf16.msra.mxu0 0
    %830 = vmatpush.bf16.msra.mxu0 0
    %831 = vmatpush.bf16.msra.mxu0 0
    %832 = vmatpush.bf16.msra.mxu0 0
    %833 = vmatpush.bf16.msra.mxu0 0
    %834 = vmatpush.bf16.msra.mxu0 0
    %835 = vmatpush.bf16.msra.mxu0 0
    %836 = vmatpush.bf16.msra.mxu0 %v824
    %837 = vmatmul.bf16.gmra.mxu0 %v827
    %v838 = vpop.f32.mrf.mxu0
    %v839 = vadd.f32 0.0, %v838
    %v840 = vpop.f32.mrf.mxu0
    %v841 = vadd.f32 0.0, %v840
    %842 = vdwg.mxu0
    %v843 = vpack.c.bf16 %v811, %v811
    %v844 = vpack.c.bf16 %v813, %v813
    %v845 = vpack.c.bf16 %v839, %v839
    %v846 = vpack.c.bf16 %v841, %v841
    %v851 = vunpack.c.l.b16 %v671
    %v852 = vunpack.c.l.b16 %v672
    %v853 = vunpack.c.l.b16 %v673
    %v854 = vunpack.c.l.b16 %v674
    %v855 = vpack.c.b16 %v852, %v851
    %v856 = vpack.c.b16 %v854, %v853
    %v863 = vunpack.c.l.b16 %v843
    %v864 = vunpack.c.l.b16 %v844
    %v865 = vunpack.c.l.b16 %v845
    %v866 = vunpack.c.l.b16 %v846
    %v867 = vpack.c.b16 %v864, %v863
    %v868 = vpack.c.b16 %v866, %v865
    %v871 = vld [vmem:[%s3] sm:$0xf]
    %v872 = vld [vmem:[%s3 + $0x4] sm:$0xf]
    %v873 = vld [vmem:[%s3 + $0x8] sm:$0xf]
    %v874 = vld [vmem:[%s3 + $0xc] sm:$0xf]
    %v875 = vld [vmem:[%s3 + $0x10] sm:$0xf]
    %v876 = vld [vmem:[%s3 + $0x14] sm:$0xf]
    %v877 = vld [vmem:[%s3 + $0x18] sm:$0xf]
    %v878 = vld [vmem:[%s3 + $0x1c] sm:$0xf]
    %v879 = vld [vmem:[%s3 + $0x20] sm:$0xf]
    %v880 = vld [vmem:[%s3 + $0x24] sm:$0xf]
    %v881 = vld [vmem:[%s3 + $0x28] sm:$0xf]
    %v882 = vld [vmem:[%s3 + $0x2c] sm:$0xf]
    %v883 = vld [vmem:[%s3 + $0x30] sm:$0xf]
    %v884 = vld [vmem:[%s3 + $0x34] sm:$0xf]
    %v885 = vld [vmem:[%s3 + $0x38] sm:$0xf]
    %v886 = vld [vmem:[%s3 + $0x3c] sm:$0xf]
    %v887 = vld [vmem:[%s3 + $0x40] sm:$0xf]
    %v888 = vld [vmem:[%s3 + $0x44] sm:$0xf]
    %v889 = vld [vmem:[%s3 + $0x48] sm:$0xf]
    %v890 = vld [vmem:[%s3 + $0x4c] sm:$0xf]
    %v891 = vld [vmem:[%s3 + $0x50] sm:$0xf]
    %v892 = vld [vmem:[%s3 + $0x54] sm:$0xf]
    %v893 = vld [vmem:[%s3 + $0x58] sm:$0xf]
    %v894 = vld [vmem:[%s3 + $0x5c] sm:$0xf]
    %v895 = vld [vmem:[%s3 + $0x60] sm:$0xf]
    %v896 = vld [vmem:[%s3 + $0x64] sm:$0xf]
    %v897 = vld [vmem:[%s3 + $0x68] sm:$0xf]
    %v898 = vld [vmem:[%s3 + $0x6c] sm:$0xf]
    %v899 = vld [vmem:[%s3 + $0x70] sm:$0xf]
    %v900 = vld [vmem:[%s3 + $0x74] sm:$0xf]
    %v901 = vld [vmem:[%s3 + $0x78] sm:$0xf]
    %v902 = vld [vmem:[%s3 + $0x7c] sm:$0xf]
    %v903 = vld [vmem:[%s4] sm:$0x1]
    %v905 = vperm.slane %v903, 0
    %v939 = vunpack.c.l.b16 %v871
    %v940 = vunpack.c.l.b16 %v872
    %v941 = vunpack.c.l.b16 %v873
    %v942 = vunpack.c.l.b16 %v874
    %v943 = vunpack.c.l.b16 %v875
    %v944 = vunpack.c.l.b16 %v876
    %v945 = vunpack.c.l.b16 %v877
    %v946 = vunpack.c.l.b16 %v878
    %v947 = vunpack.c.l.b16 %v879
    %v948 = vunpack.c.l.b16 %v880
    %v949 = vunpack.c.l.b16 %v881
    %v950 = vunpack.c.l.b16 %v882
    %v951 = vunpack.c.l.b16 %v883
    %v952 = vunpack.c.l.b16 %v884
    %v953 = vunpack.c.l.b16 %v885
    %v954 = vunpack.c.l.b16 %v886
    %v955 = vunpack.c.l.b16 %v887
    %v956 = vunpack.c.l.b16 %v888
    %v957 = vunpack.c.l.b16 %v889
    %v958 = vunpack.c.l.b16 %v890
    %v959 = vunpack.c.l.b16 %v891
    %v960 = vunpack.c.l.b16 %v892
    %v961 = vunpack.c.l.b16 %v893
    %v962 = vunpack.c.l.b16 %v894
    %v963 = vunpack.c.l.b16 %v895
    %v964 = vunpack.c.l.b16 %v896
    %v965 = vunpack.c.l.b16 %v897
    %v966 = vunpack.c.l.b16 %v898
    %v967 = vunpack.c.l.b16 %v899
    %v968 = vunpack.c.l.b16 %v900
    %v969 = vunpack.c.l.b16 %v901
    %v970 = vunpack.c.l.b16 %v902
    %v971 = vpack.c.b16 %v940, %v939
    %v972 = vpack.c.b16 %v942, %v941
    %v973 = vpack.c.b16 %v944, %v943
    %v974 = vpack.c.b16 %v946, %v945
    %v975 = vpack.c.b16 %v948, %v947
    %v976 = vpack.c.b16 %v950, %v949
    %v977 = vpack.c.b16 %v952, %v951
    %v978 = vpack.c.b16 %v954, %v953
    %v979 = vpack.c.b16 %v956, %v955
    %v980 = vpack.c.b16 %v958, %v957
    %v981 = vpack.c.b16 %v960, %v959
    %v982 = vpack.c.b16 %v962, %v961
    %v983 = vpack.c.b16 %v964, %v963
    %v984 = vpack.c.b16 %v966, %v965
    %v985 = vpack.c.b16 %v968, %v967
    %v986 = vpack.c.b16 %v970, %v969
    %1003 = vmatpush.bf16.msra.mxu0 %v978
    %1004 = vmatpush.bf16.msra.mxu0 %v977
    %1005 = vmatpush.bf16.msra.mxu0 %v976
    %1006 = vmatpush.bf16.msra.mxu0 %v975
    %1007 = vmatpush.bf16.msra.mxu0 %v974
    %1008 = vmatpush.bf16.msra.mxu0 %v973
    %1009 = vmatpush.bf16.msra.mxu0 %v972
    %1010 = vmatpush.bf16.msra.mxu0 %v971
    %1011 = vmatmul.bf16.gmra.mxu0 %v855
    %v1012 = vpop.f32.mrf.mxu0
    %v1013 = vadd.f32 %v905, %v1012
    %v1014 = vpop.f32.mrf.mxu0
    %v1015 = vadd.f32 %v905, %v1014
    %1016 = vmatmul.bf16.gmra.mxu0 %v856
    %v1017 = vpop.f32.mrf.mxu0
    %v1018 = vadd.f32 %v905, %v1017
    %v1019 = vpop.f32.mrf.mxu0
    %v1020 = vadd.f32 %v905, %v1019
    %1021 = vdwg.mxu0
    %1022 = vmatpush.bf16.msra.mxu0 %v986
    %1023 = vmatpush.bf16.msra.mxu0 %v985
    %1024 = vmatpush.bf16.msra.mxu0 %v984
    %1025 = vmatpush.bf16.msra.mxu0 %v983
    %1026 = vmatpush.bf16.msra.mxu0 %v982
    %1027 = vmatpush.bf16.msra.mxu0 %v981
    %1028 = vmatpush.bf16.msra.mxu0 %v980
    %1029 = vmatpush.bf16.msra.mxu0 %v979
    %1030 = vmatmul.bf16.gmra.mxu0 %v867
    %v1031 = vpop.f32.mrf.mxu0
    %v1032 = vadd.f32 %v1013, %v1031
    %v1033 = vpop.f32.mrf.mxu0
    %v1034 = vadd.f32 %v1015, %v1033
    %1035 = vmatmul.bf16.gmra.mxu0 %v868
    %v1036 = vpop.f32.mrf.mxu0
    %v1037 = vadd.f32 %v1018, %v1036
    %v1038 = vpop.f32.mrf.mxu0
    %v1039 = vadd.f32 %v1020, %v1038
    %1040 = vdwg.mxu0
    %v1041 = vadd.f32 %v50, %v1032
    %v1042 = vadd.f32 %v51, %v1034
    %v1043 = vadd.f32 %v52, %v1037
    %v1044 = vadd.f32 %v53, %v1039
    %v1045 = vsel %vm54, %v1041, 0.0
    %1046 = vadd.xlane.f32.xlu0 %v1045
    %v1047 = vpop.xlane.xlu0 %1046
    %v1048 = vsel %vm54, %v1042, 0.0
    %1049 = vadd.xlane.f32.xlu0 %v1048
    %v1050 = vpop.xlane.xlu0 %1049
    %v1051 = vsel %vm54, %v1043, 0.0
    %1052 = vadd.xlane.f32.xlu0 %v1051
    %v1053 = vpop.xlane.xlu0 %1052
    %v1054 = vsel %vm54, %v1044, 0.0
    %1055 = vadd.xlane.f32.xlu0 %v1054
    %v1056 = vpop.xlane.xlu0 %1055
    %v1057 = vmul.f32 %v1047, %v73
    %v1058 = vmul.f32 %v1050, %v73
    %v1059 = vmul.f32 %v1053, %v73
    %v1060 = vmul.f32 %v1056, %v73
    %v1061 = vsub.f32 %v1041, %v1057
    %v1062 = vsub.f32 %v1042, %v1058
    %v1063 = vsub.f32 %v1043, %v1059
    %v1064 = vsub.f32 %v1044, %v1060
    %v1065 = vmul.f32 %v1061, %v1061
    %v1066 = vmul.f32 %v1062, %v1062
    %v1067 = vmul.f32 %v1063, %v1063
    %v1068 = vmul.f32 %v1064, %v1064
    %v1069 = vsel %vm54, %v1065, 0.0
    %1070 = vadd.xlane.f32.xlu0 %v1069
    %v1071 = vpop.xlane.xlu0 %1070
    %v1072 = vsel %vm54, %v1066, 0.0
    %1073 = vadd.xlane.f32.xlu0 %v1072
    %v1074 = vpop.xlane.xlu0 %1073
    %v1075 = vsel %vm54, %v1067, 0.0
    %1076 = vadd.xlane.f32.xlu0 %v1075
    %v1077 = vpop.xlane.xlu0 %1076
    %v1078 = vsel %vm54, %v1068, 0.0
    %1079 = vadd.xlane.f32.xlu0 %v1078
    %v1080 = vpop.xlane.xlu0 %1079
    %v1081 = vmul.f32 %v1071, %v73
    %v1082 = vmul.f32 %v1074, %v73
    %v1083 = vmul.f32 %v1077, %v73
    %v1084 = vmul.f32 %v1080, %v73
    %v1085 = vadd.f32 %v1081, 1e-06
    %v1086 = vadd.f32 %v1082, 1e-06
    %v1087 = vadd.f32 %v1083, 1e-06
    %v1088 = vadd.f32 %v1084, 1e-06
    %v1089 = vrsqrt.pop %v1085
    %v1090 = vmul.f32 %v1089, %v1085
    %v1091 = vmul.f32 %v1090, %v1089
    %v1092 = vmul.f32 0.5, %v1091
    %v1093 = vsub.f32 1.5, %v1092
    %v1094 = vmul.f32 %v1089, %v1093
    %vm1095 = vweird.f32 %v1085
    %vm1096 = vweird.f32 %v1089
    %vm1097 = vmor %vm1095, %vm1096
    %v1098 = vsel %vm1097, %v1089, %v1094
    %v1099 = vrsqrt.pop %v1086
    %v1100 = vmul.f32 %v1099, %v1086
    %v1101 = vmul.f32 %v1100, %v1099
    %v1102 = vmul.f32 0.5, %v1101
    %v1103 = vsub.f32 1.5, %v1102
    %v1104 = vmul.f32 %v1099, %v1103
    %vm1105 = vweird.f32 %v1086
    %vm1106 = vweird.f32 %v1099
    %vm1107 = vmor %vm1105, %vm1106
    %v1108 = vsel %vm1107, %v1099, %v1104
    %v1109 = vrsqrt.pop %v1087
    %v1110 = vmul.f32 %v1109, %v1087
    %v1111 = vmul.f32 %v1110, %v1109
    %v1112 = vmul.f32 0.5, %v1111
    %v1113 = vsub.f32 1.5, %v1112
    %v1114 = vmul.f32 %v1109, %v1113
    %vm1115 = vweird.f32 %v1087
    %vm1116 = vweird.f32 %v1109
    %vm1117 = vmor %vm1115, %vm1116
    %v1118 = vsel %vm1117, %v1109, %v1114
    %v1119 = vrsqrt.pop %v1088
    %v1120 = vmul.f32 %v1119, %v1088
    %v1121 = vmul.f32 %v1120, %v1119
    %v1122 = vmul.f32 0.5, %v1121
    %v1123 = vsub.f32 1.5, %v1122
    %v1124 = vmul.f32 %v1119, %v1123
    %vm1125 = vweird.f32 %v1088
    %vm1126 = vweird.f32 %v1119
    %vm1127 = vmor %vm1125, %vm1126
    %v1128 = vsel %vm1127, %v1119, %v1124
    %v1129 = vmul.f32 %v1061, %v1098
    %v1130 = vmul.f32 %v1062, %v1108
    %v1131 = vmul.f32 %v1063, %v1118
    %v1132 = vmul.f32 %v1064, %v1128
    %v1133 = vpack.c.bf16 %v1130, %v1129
    %v1134 = vpack.c.bf16 %v1132, %v1131
    %v1135 = vld [vmem:[#allocation2] sm:$0xff]
    %v1136 = vld [vmem:[#allocation2 + $0x8] sm:$0xf]
    %v1137 = vld [vmem:[#allocation2 + $0xc] sm:$0xff]
    %v1138 = vld [vmem:[#allocation2 + $0x14] sm:$0xf]
    %v1139 = vld [vmem:[#allocation2 + $0x18] sm:$0xff]
    %v1140 = vld [vmem:[#allocation2 + $0x20] sm:$0xf]
    %v1141 = vld [vmem:[#allocation2 + $0x24] sm:$0xff]
    %v1142 = vld [vmem:[#allocation2 + $0x2c] sm:$0xf]
    %v1143 = vld [vmem:[#allocation2 + $0x30] sm:$0xff]
    %v1144 = vld [vmem:[#allocation2 + $0x38] sm:$0xf]
    %v1145 = vld [vmem:[#allocation2 + $0x3c] sm:$0xff]
    %v1146 = vld [vmem:[#allocation2 + $0x44] sm:$0xf]
    %v1147 = vld [vmem:[#allocation2 + $0x48] sm:$0xff]
    %v1148 = vld [vmem:[#allocation2 + $0x50] sm:$0xf]
    %v1149 = vld [vmem:[#allocation2 + $0x54] sm:$0xff]
    %v1150 = vld [vmem:[#allocation2 + $0x5c] sm:$0xf]
    %v1151 = vld [vmem:[#allocation2 + $0x60] sm:$0xff]
    %v1152 = vld [vmem:[#allocation2 + $0x68] sm:$0xf]
    %v1153 = vld [vmem:[#allocation2 + $0x6c] sm:$0xff]
    %v1154 = vld [vmem:[#allocation2 + $0x74] sm:$0xf]
    %v1155 = vld [vmem:[#allocation2 + $0x78] sm:$0xff]
    %v1156 = vld [vmem:[#allocation2 + $0x80] sm:$0xf]
    %v1157 = vld [vmem:[#allocation2 + $0x84] sm:$0xff]
    %v1158 = vld [vmem:[#allocation2 + $0x8c] sm:$0xf]
    %v1159 = vld [vmem:[%s6] sm:$0x7]
    %v1161 = vperm.slane %v1159, 0
    %v1162 = vperm.slane %v1159, 1
    %v1163 = vperm.slane %v1159, 2
    %v1191 = vunpack.c.l.b16 %v1135
    %v1192 = vunpack.c.h.b16 %v1135
    %v1193 = vunpack.c.l.b16 %v1136
    %v1194 = vunpack.c.l.b16 %v1137
    %v1195 = vunpack.c.h.b16 %v1137
    %v1196 = vunpack.c.l.b16 %v1138
    %v1197 = vunpack.c.l.b16 %v1139
    %v1198 = vunpack.c.h.b16 %v1139
    %v1199 = vunpack.c.l.b16 %v1140
    %v1200 = vunpack.c.l.b16 %v1141
    %v1201 = vunpack.c.h.b16 %v1141
    %v1202 = vunpack.c.l.b16 %v1142
    %v1203 = vunpack.c.l.b16 %v1143
    %v1204 = vunpack.c.h.b16 %v1143
    %v1205 = vunpack.c.l.b16 %v1144
    %v1206 = vunpack.c.l.b16 %v1145
    %v1207 = vunpack.c.h.b16 %v1145
    %v1208 = vunpack.c.l.b16 %v1146
    %v1209 = vunpack.c.l.b16 %v1147
    %v1210 = vunpack.c.h.b16 %v1147
    %v1211 = vunpack.c.l.b16 %v1148
    %v1212 = vunpack.c.l.b16 %v1149
    %v1213 = vunpack.c.h.b16 %v1149
    %v1214 = vunpack.c.l.b16 %v1150
    %v1215 = vunpack.c.l.b16 %v1151
    %v1216 = vunpack.c.h.b16 %v1151
    %v1217 = vunpack.c.l.b16 %v1152
    %v1218 = vunpack.c.l.b16 %v1153
    %v1219 = vunpack.c.h.b16 %v1153
    %v1220 = vunpack.c.l.b16 %v1154
    %v1221 = vunpack.c.l.b16 %v1155
    %v1222 = vunpack.c.h.b16 %v1155
    %v1223 = vunpack.c.l.b16 %v1156
    %v1224 = vunpack.c.l.b16 %v1157
    %v1225 = vunpack.c.h.b16 %v1157
    %v1226 = vunpack.c.l.b16 %v1158
    %v1227 = vpack.c.b16 %v1194, %v1191
    %v1228 = vpack.c.b16 %v1195, %v1192
    %v1229 = vpack.c.b16 %v1196, %v1193
    %v1230 = vpack.c.b16 %v1200, %v1197
    %v1231 = vpack.c.b16 %v1201, %v1198
    %v1232 = vpack.c.b16 %v1202, %v1199
    %v1233 = vpack.c.b16 %v1206, %v1203
    %v1234 = vpack.c.b16 %v1207, %v1204
    %v1235 = vpack.c.b16 %v1208, %v1205
    %v1236 = vpack.c.b16 %v1212, %v1209
    %v1237 = vpack.c.b16 %v1213, %v1210
    %v1238 = vpack.c.b16 %v1214, %v1211
    %v1239 = vpack.c.b16 %v1218, %v1215
    %v1240 = vpack.c.b16 %v1219, %v1216
    %v1241 = vpack.c.b16 %v1220, %v1217
    %v1242 = vpack.c.b16 %v1224, %v1221
    %v1243 = vpack.c.b16 %v1225, %v1222
    %v1244 = vpack.c.b16 %v1226, %v1223
    %v1264 = vsel %vm54, %v1133, 0
    %v1267 = vsel %vm54, %v1134, 0
    %1269 = vmatpush.bf16.msra.mxu0 0
    %1270 = vmatpush.bf16.msra.mxu0 0
    %1271 = vmatpush.bf16.msra.mxu0 %v1242
    %1272 = vmatpush.bf16.msra.mxu0 %v1239
    %1273 = vmatpush.bf16.msra.mxu0 %v1236
    %1274 = vmatpush.bf16.msra.mxu0 %v1233
    %1275 = vmatpush.bf16.msra.mxu0 %v1230
    %1276 = vmatpush.bf16.msra.mxu0 %v1227
    %1277 = vmatmul.bf16.gmra.mxu0 %v1264
    %v1278 = vpop.f32.mrf.mxu0
    %v1279 = vadd.f32 %v1161, %v1278
    %v1280 = vpop.f32.mrf.mxu0
    %v1281 = vadd.f32 %v1161, %v1280
    %1282 = vmatmul.bf16.gmra.mxu0 %v1267
    %v1283 = vpop.f32.mrf.mxu0
    %v1284 = vadd.f32 %v1161, %v1283
    %v1285 = vpop.f32.mrf.mxu0
    %v1286 = vadd.f32 %v1161, %v1285
    %1287 = vdwg.mxu0
    %1288 = vmatpush.bf16.msra.mxu0 0
    %1289 = vmatpush.bf16.msra.mxu0 0
    %1290 = vmatpush.bf16.msra.mxu0 %v1243
    %1291 = vmatpush.bf16.msra.mxu0 %v1240
    %1292 = vmatpush.bf16.msra.mxu0 %v1237
    %1293 = vmatpush.bf16.msra.mxu0 %v1234
    %1294 = vmatpush.bf16.msra.mxu0 %v1231
    %1295 = vmatpush.bf16.msra.mxu0 %v1228
    %1296 = vmatmul.bf16.gmra.mxu0 %v1264
    %v1297 = vpop.f32.mrf.mxu0
    %v1298 = vadd.f32 %v1162, %v1297
    %v1299 = vpop.f32.mrf.mxu0
    %v1300 = vadd.f32 %v1162, %v1299
    %1301 = vmatmul.bf16.gmra.mxu0 %v1267
    %v1302 = vpop.f32.mrf.mxu0
    %v1303 = vadd.f32 %v1162, %v1302
    %v1304 = vpop.f32.mrf.mxu0
    %v1305 = vadd.f32 %v1162, %v1304
    %1306 = vdwg.mxu0
    %1307 = vmatpush.bf16.msra.mxu0 0
    %1308 = vmatpush.bf16.msra.mxu0 0
    %1309 = vmatpush.bf16.msra.mxu0 %v1244
    %1310 = vmatpush.bf16.msra.mxu0 %v1241
    %1311 = vmatpush.bf16.msra.mxu0 %v1238
    %1312 = vmatpush.bf16.msra.mxu0 %v1235
    %1313 = vmatpush.bf16.msra.mxu0 %v1232
    %1314 = vmatpush.bf16.msra.mxu0 %v1229
    %1315 = vmatmul.bf16.gmra.mxu0 %v1264
    %v1316 = vpop.f32.mrf.mxu0
    %v1317 = vadd.f32 %v1163, %v1316
    %v1318 = vpop.f32.mrf.mxu0
    %v1319 = vadd.f32 %v1163, %v1318
    %1320 = vmatmul.bf16.gmra.mxu0 %v1267
    %v1321 = vpop.f32.mrf.mxu0
    %v1322 = vadd.f32 %v1163, %v1321
    %v1323 = vpop.f32.mrf.mxu0
    %v1324 = vadd.f32 %v1163, %v1323
    %1325 = vdwg.mxu0
    %v1326 = vmul.f32 %v1279, %v1279
    %v1327 = vmul.f32 %v1298, %v1298
    %v1328 = vmul.f32 %v1317, %v1317
    %v1329 = vmul.f32 %v1281, %v1281
    %v1330 = vmul.f32 %v1300, %v1300
    %v1331 = vmul.f32 %v1319, %v1319
    %v1332 = vmul.f32 %v1284, %v1284
    %v1333 = vmul.f32 %v1303, %v1303
    %v1334 = vmul.f32 %v1322, %v1322
    %v1335 = vmul.f32 %v1286, %v1286
    %v1336 = vmul.f32 %v1305, %v1305
    %v1337 = vmul.f32 %v1324, %v1324
    %v1338 = vmul.f32 %v1279, %v1326
    %v1339 = vmul.f32 %v1298, %v1327
    %v1340 = vmul.f32 %v1317, %v1328
    %v1341 = vmul.f32 %v1281, %v1329
    %v1342 = vmul.f32 %v1300, %v1330
    %v1343 = vmul.f32 %v1319, %v1331
    %v1344 = vmul.f32 %v1284, %v1332
    %v1345 = vmul.f32 %v1303, %v1333
    %v1346 = vmul.f32 %v1322, %v1334
    %v1347 = vmul.f32 %v1286, %v1335
    %v1348 = vmul.f32 %v1305, %v1336
    %v1349 = vmul.f32 %v1324, %v1337
    %v1350 = vmul.f32 %v1338, 0.044715
    %v1351 = vmul.f32 %v1339, 0.044715
    %v1352 = vmul.f32 %v1340, 0.044715
    %v1353 = vmul.f32 %v1341, 0.044715
    %v1354 = vmul.f32 %v1342, 0.044715
    %v1355 = vmul.f32 %v1343, 0.044715
    %v1356 = vmul.f32 %v1344, 0.044715
    %v1357 = vmul.f32 %v1345, 0.044715
    %v1358 = vmul.f32 %v1346, 0.044715
    %v1359 = vmul.f32 %v1347, 0.044715
    %v1360 = vmul.f32 %v1348, 0.044715
    %v1361 = vmul.f32 %v1349, 0.044715
    %v1362 = vadd.f32 %v1279, %v1350
    %v1363 = vadd.f32 %v1298, %v1351
    %v1364 = vadd.f32 %v1317, %v1352
    %v1365 = vadd.f32 %v1281, %v1353
    %v1366 = vadd.f32 %v1300, %v1354
    %v1367 = vadd.f32 %v1319, %v1355
    %v1368 = vadd.f32 %v1284, %v1356
    %v1369 = vadd.f32 %v1303, %v1357
    %v1370 = vadd.f32 %v1322, %v1358
    %v1371 = vadd.f32 %v1286, %v1359
    %v1372 = vadd.f32 %v1305, %v1360
    %v1373 = vadd.f32 %v1324, %v1361
    %v1374 = vmul.f32 %v1362, 0.7978846
    %v1375 = vmul.f32 %v1363, 0.7978846
    %v1376 = vmul.f32 %v1364, 0.7978846
    %v1377 = vmul.f32 %v1365, 0.7978846
    %v1378 = vmul.f32 %v1366, 0.7978846
    %v1379 = vmul.f32 %v1367, 0.7978846
    %v1380 = vmul.f32 %v1368, 0.7978846
    %v1381 = vmul.f32 %v1369, 0.7978846
    %v1382 = vmul.f32 %v1370, 0.7978846
    %v1383 = vmul.f32 %v1371, 0.7978846
    %v1384 = vmul.f32 %v1372, 0.7978846
    %v1385 = vmul.f32 %v1373, 0.7978846
    %v1386 = vtanh.pop %v1374
    %v1387 = vtanh.pop %v1375
    %v1388 = vtanh.pop %v1376
    %v1389 = vtanh.pop %v1377
    %v1390 = vtanh.pop %v1378
    %v1391 = vtanh.pop %v1379
    %v1392 = vtanh.pop %v1380
    %v1393 = vtanh.pop %v1381
    %v1394 = vtanh.pop %v1382
    %v1395 = vtanh.pop %v1383
    %v1396 = vtanh.pop %v1384
    %v1397 = vtanh.pop %v1385
    %v1398 = vadd.f32 %v1386, 1.0
    %v1399 = vadd.f32 %v1387, 1.0
    %v1400 = vadd.f32 %v1388, 1.0
    %v1401 = vadd.f32 %v1389, 1.0
    %v1402 = vadd.f32 %v1390, 1.0
    %v1403 = vadd.f32 %v1391, 1.0
    %v1404 = vadd.f32 %v1392, 1.0
    %v1405 = vadd.f32 %v1393, 1.0
    %v1406 = vadd.f32 %v1394, 1.0
    %v1407 = vadd.f32 %v1395, 1.0
    %v1408 = vadd.f32 %v1396, 1.0
    %v1409 = vadd.f32 %v1397, 1.0
    %v1410 = vmul.f32 %v1398, 0.5
    %v1411 = vmul.f32 %v1399, 0.5
    %v1412 = vmul.f32 %v1400, 0.5
    %v1413 = vmul.f32 %v1401, 0.5
    %v1414 = vmul.f32 %v1402, 0.5
    %v1415 = vmul.f32 %v1403, 0.5
    %v1416 = vmul.f32 %v1404, 0.5
    %v1417 = vmul.f32 %v1405, 0.5
    %v1418 = vmul.f32 %v1406, 0.5
    %v1419 = vmul.f32 %v1407, 0.5
    %v1420 = vmul.f32 %v1408, 0.5
    %v1421 = vmul.f32 %v1409, 0.5
    %v1422 = vmul.f32 %v1279, %v1410
    %v1423 = vmul.f32 %v1298, %v1411
    %v1424 = vmul.f32 %v1317, %v1412
    %v1425 = vmul.f32 %v1281, %v1413
    %v1426 = vmul.f32 %v1300, %v1414
    %v1427 = vmul.f32 %v1319, %v1415
    %v1428 = vmul.f32 %v1284, %v1416
    %v1429 = vmul.f32 %v1303, %v1417
    %v1430 = vmul.f32 %v1322, %v1418
    %v1431 = vmul.f32 %v1286, %v1419
    %v1432 = vmul.f32 %v1305, %v1420
    %v1433 = vmul.f32 %v1324, %v1421
    %v1434 = vpack.c.bf16 %v1425, %v1422
    %v1435 = vpack.c.bf16 %v1426, %v1423
    %v1436 = vpack.c.bf16 %v1427, %v1424
    %v1437 = vpack.c.bf16 %v1431, %v1428
    %v1438 = vpack.c.bf16 %v1432, %v1429
    %v1439 = vpack.c.bf16 %v1433, %v1430
    %v1440 = vld [vmem:[%s7] sm:$0xf]
    %v1441 = vld [vmem:[%s7 + $0x4] sm:$0xf]
    %v1442 = vld [vmem:[%s7 + $0x8] sm:$0xf]
    %v1443 = vld [vmem:[%s7 + $0xc] sm:$0xf]
    %v1444 = vld [vmem:[%s7 + $0x10] sm:$0xf]
    %v1445 = vld [vmem:[%s7 + $0x14] sm:$0xf]
    %v1446 = vld [vmem:[%s7 + $0x18] sm:$0xf]
    %v1447 = vld [vmem:[%s7 + $0x1c] sm:$0xf]
    %v1448 = vld [vmem:[%s7 + $0x20] sm:$0xf]
    %v1449 = vld [vmem:[%s7 + $0x24] sm:$0xf]
    %v1450 = vld [vmem:[%s7 + $0x28] sm:$0xf]
    %v1451 = vld [vmem:[%s7 + $0x2c] sm:$0xf]
    %v1452 = vld [vmem:[%s7 + $0x30] sm:$0xf]
    %v1453 = vld [vmem:[%s7 + $0x34] sm:$0xf]
    %v1454 = vld [vmem:[%s7 + $0x38] sm:$0xf]
    %v1455 = vld [vmem:[%s7 + $0x3c] sm:$0xf]
    %v1456 = vld [vmem:[%s7 + $0x40] sm:$0xf]
    %v1457 = vld [vmem:[%s7 + $0x44] sm:$0xf]
    %v1458 = vld [vmem:[%s7 + $0x48] sm:$0xf]
    %v1459 = vld [vmem:[%s7 + $0x4c] sm:$0xf]
    %v1460 = vld [vmem:[%s7 + $0x50] sm:$0xf]
    %v1461 = vld [vmem:[%s7 + $0x54] sm:$0xf]
    %v1462 = vld [vmem:[%s7 + $0x58] sm:$0xf]
    %v1463 = vld [vmem:[%s7 + $0x5c] sm:$0xf]
    %v1464 = vld [vmem:[%s7 + $0x60] sm:$0xf]
    %v1465 = vld [vmem:[%s7 + $0x64] sm:$0xf]
    %v1466 = vld [vmem:[%s7 + $0x68] sm:$0xf]
    %v1467 = vld [vmem:[%s7 + $0x6c] sm:$0xf]
    %v1468 = vld [vmem:[%s7 + $0x70] sm:$0xf]
    %v1469 = vld [vmem:[%s7 + $0x74] sm:$0xf]
    %v1470 = vld [vmem:[%s7 + $0x78] sm:$0xf]
    %v1471 = vld [vmem:[%s7 + $0x7c] sm:$0xf]
    %v1472 = vld [vmem:[%s7 + $0x80] sm:$0xf]
    %v1473 = vld [vmem:[%s7 + $0x84] sm:$0xf]
    %v1474 = vld [vmem:[%s7 + $0x88] sm:$0xf]
    %v1475 = vld [vmem:[%s7 + $0x8c] sm:$0xf]
    %v1476 = vld [vmem:[%s7 + $0x90] sm:$0xf]
    %v1477 = vld [vmem:[%s7 + $0x94] sm:$0xf]
    %v1478 = vld [vmem:[%s7 + $0x98] sm:$0xf]
    %v1479 = vld [vmem:[%s7 + $0x9c] sm:$0xf]
    %v1480 = vld [vmem:[%s7 + $0xa0] sm:$0xf]
    %v1481 = vld [vmem:[%s7 + $0xa4] sm:$0xf]
    %v1482 = vld [vmem:[%s7 + $0xa8] sm:$0xf]
    %v1483 = vld [vmem:[%s7 + $0xac] sm:$0xf]
    %v1484 = vld [vmem:[%s7 + $0xb0] sm:$0xf]
    %v1485 = vld [vmem:[%s7 + $0xb4] sm:$0xf]
    %v1486 = vld [vmem:[%s7 + $0xb8] sm:$0xf]
    %v1487 = vld [vmem:[%s7 + $0xbc] sm:$0xf]
    %v1488 = vld [vmem:[%s8] sm:$0x1]
    %v1490 = vperm.slane %v1488, 0
    %v1540 = vunpack.c.l.b16 %v1440
    %v1541 = vunpack.c.l.b16 %v1441
    %v1542 = vunpack.c.l.b16 %v1442
    %v1543 = vunpack.c.l.b16 %v1443
    %v1544 = vunpack.c.l.b16 %v1444
    %v1545 = vunpack.c.l.b16 %v1445
    %v1546 = vunpack.c.l.b16 %v1446
    %v1547 = vunpack.c.l.b16 %v1447
    %v1548 = vunpack.c.l.b16 %v1448
    %v1549 = vunpack.c.l.b16 %v1449
    %v1550 = vunpack.c.l.b16 %v1450
    %v1551 = vunpack.c.l.b16 %v1451
    %v1552 = vunpack.c.l.b16 %v1452
    %v1553 = vunpack.c.l.b16 %v1453
    %v1554 = vunpack.c.l.b16 %v1454
    %v1555 = vunpack.c.l.b16 %v1455
    %v1556 = vunpack.c.l.b16 %v1456
    %v1557 = vunpack.c.l.b16 %v1457
    %v1558 = vunpack.c.l.b16 %v1458
    %v1559 = vunpack.c.l.b16 %v1459
    %v1560 = vunpack.c.l.b16 %v1460
    %v1561 = vunpack.c.l.b16 %v1461
    %v1562 = vunpack.c.l.b16 %v1462
    %v1563 = vunpack.c.l.b16 %v1463
    %v1564 = vunpack.c.l.b16 %v1464
    %v1565 = vunpack.c.l.b16 %v1465
    %v1566 = vunpack.c.l.b16 %v1466
    %v1567 = vunpack.c.l.b16 %v1467
    %v1568 = vunpack.c.l.b16 %v1468
    %v1569 = vunpack.c.l.b16 %v1469
    %v1570 = vunpack.c.l.b16 %v1470
    %v1571 = vunpack.c.l.b16 %v1471
    %v1572 = vunpack.c.l.b16 %v1472
    %v1573 = vunpack.c.l.b16 %v1473
    %v1574 = vunpack.c.l.b16 %v1474
    %v1575 = vunpack.c.l.b16 %v1475
    %v1576 = vunpack.c.l.b16 %v1476
    %v1577 = vunpack.c.l.b16 %v1477
    %v1578 = vunpack.c.l.b16 %v1478
    %v1579 = vunpack.c.l.b16 %v1479
    %v1580 = vunpack.c.l.b16 %v1480
    %v1581 = vunpack.c.l.b16 %v1481
    %v1582 = vunpack.c.l.b16 %v1482
    %v1583 = vunpack.c.l.b16 %v1483
    %v1584 = vunpack.c.l.b16 %v1484
    %v1585 = vunpack.c.l.b16 %v1485
    %v1586 = vunpack.c.l.b16 %v1486
    %v1587 = vunpack.c.l.b16 %v1487
    %v1588 = vpack.c.b16 %v1541, %v1540
    %v1589 = vpack.c.b16 %v1543, %v1542
    %v1590 = vpack.c.b16 %v1545, %v1544
    %v1591 = vpack.c.b16 %v1547, %v1546
    %v1592 = vpack.c.b16 %v1549, %v1548
    %v1593 = vpack.c.b16 %v1551, %v1550
    %v1594 = vpack.c.b16 %v1553, %v1552
    %v1595 = vpack.c.b16 %v1555, %v1554
    %v1596 = vpack.c.b16 %v1557, %v1556
    %v1597 = vpack.c.b16 %v1559, %v1558
    %v1598 = vpack.c.b16 %v1561, %v1560
    %v1599 = vpack.c.b16 %v1563, %v1562
    %v1600 = vpack.c.b16 %v1565, %v1564
    %v1601 = vpack.c.b16 %v1567, %v1566
    %v1602 = vpack.c.b16 %v1569, %v1568
    %v1603 = vpack.c.b16 %v1571, %v1570
    %v1604 = vpack.c.b16 %v1573, %v1572
    %v1605 = vpack.c.b16 %v1575, %v1574
    %v1606 = vpack.c.b16 %v1577, %v1576
    %v1607 = vpack.c.b16 %v1579, %v1578
    %v1608 = vpack.c.b16 %v1581, %v1580
    %v1609 = vpack.c.b16 %v1583, %v1582
    %v1610 = vpack.c.b16 %v1585, %v1584
    %v1611 = vpack.c.b16 %v1587, %v1586
    %1636 = vmatpush.bf16.msra.mxu0 %v1595
    %1637 = vmatpush.bf16.msra.mxu0 %v1594
    %1638 = vmatpush.bf16.msra.mxu0 %v1593
    %1639 = vmatpush.bf16.msra.mxu0 %v1592
    %1640 = vmatpush.bf16.msra.mxu0 %v1591
    %1641 = vmatpush.bf16.msra.mxu0 %v1590
    %1642 = vmatpush.bf16.msra.mxu0 %v1589
    %1643 = vmatpush.bf16.msra.mxu0 %v1588
    %1644 = vmatmul.bf16.gmra.mxu0 %v1434
    %v1645 = vpop.f32.mrf.mxu0
    %v1646 = vadd.f32 %v1490, %v1645
    %v1647 = vpop.f32.mrf.mxu0
    %v1648 = vadd.f32 %v1490, %v1647
    %1649 = vmatmul.bf16.gmra.mxu0 %v1437
    %v1650 = vpop.f32.mrf.mxu0
    %v1651 = vadd.f32 %v1490, %v1650
    %v1652 = vpop.f32.mrf.mxu0
    %v1653 = vadd.f32 %v1490, %v1652
    %1654 = vdwg.mxu0
    %1655 = vmatpush.bf16.msra.mxu0 %v1603
    %1656 = vmatpush.bf16.msra.mxu0 %v1602
    %1657 = vmatpush.bf16.msra.mxu0 %v1601
    %1658 = vmatpush.bf16.msra.mxu0 %v1600
    %1659 = vmatpush.bf16.msra.mxu0 %v1599
    %1660 = vmatpush.bf16.msra.mxu0 %v1598
    %1661 = vmatpush.bf16.msra.mxu0 %v1597
    %1662 = vmatpush.bf16.msra.mxu0 %v1596
    %1663 = vmatmul.bf16.gmra.mxu0 %v1435
    %v1664 = vpop.f32.mrf.mxu0
    %v1665 = vadd.f32 %v1646, %v1664
    %v1666 = vpop.f32.mrf.mxu0
    %v1667 = vadd.f32 %v1648, %v1666
    %1668 = vmatmul.bf16.gmra.mxu0 %v1438
    %v1669 = vpop.f32.mrf.mxu0
    %v1670 = vadd.f32 %v1651, %v1669
    %v1671 = vpop.f32.mrf.mxu0
    %v1672 = vadd.f32 %v1653, %v1671
    %1673 = vdwg.mxu0
    %1674 = vmatpush.bf16.msra.mxu0 %v1611
    %1675 = vmatpush.bf16.msra.mxu0 %v1610
    %1676 = vmatpush.bf16.msra.mxu0 %v1609
    %1677 = vmatpush.bf16.msra.mxu0 %v1608
    %1678 = vmatpush.bf16.msra.mxu0 %v1607
    %1679 = vmatpush.bf16.msra.mxu0 %v1606
    %1680 = vmatpush.bf16.msra.mxu0 %v1605
    %1681 = vmatpush.bf16.msra.mxu0 %v1604
    %1682 = vmatmul.bf16.gmra.mxu0 %v1436
    %v1683 = vpop.f32.mrf.mxu0
    %v1684 = vadd.f32 %v1665, %v1683
    %v1685 = vpop.f32.mrf.mxu0
    %v1686 = vadd.f32 %v1667, %v1685
    %1687 = vmatmul.bf16.gmra.mxu0 %v1439
    %v1688 = vpop.f32.mrf.mxu0
    %v1689 = vadd.f32 %v1670, %v1688
    %v1690 = vpop.f32.mrf.mxu0
    %v1691 = vadd.f32 %v1672, %v1690
    %1692 = vdwg.mxu0
    %v1693 = vadd.f32 %v1041, %v1684
    %v1694 = vadd.f32 %v1042, %v1686
    %v1695 = vadd.f32 %v1043, %v1689
    %v1696 = vadd.f32 %v1044, %v1691
    %1697 = vst.msk [vmem:[#allocation5] sm:$0xff] %vm54, %v1693
    %1698 = vst.msk [vmem:[#allocation5 + $0x8] sm:$0xff] %vm54, %v1694
    %1699 = vst.msk [vmem:[#allocation5 + $0x10] sm:$0xff] %vm54, %v1695
    %1700 = vst.msk [vmem:[#allocation5 + $0x18] sm:$0xff] %vm54, %v1696
    // Predicated region
    $region42: #{tpu_custom_call.1} parent=1 // pred_check
      _
    $region43: #{tpu_custom_call.1} parent=1 // pred_check_branch
      %1702 = sbr.rel (0) target = $region45
    $region44: #{tpu_custom_call.1} parent=1 // pred_region
      %1704 = vsyncadd [#allocation4], 0
      %s1705 = sshll.u32 [#allocation5], 4
      %s1706 = int_to_ptr.vmem [resolvable:$true] %s1705
      %s1707 = sshll.u32 %s9, 4
      %s1708 = int_to_ptr.hbm [resolvable:$true] %s1707
      %1713 = dma.vmem_to_hbm [thread:$0]  %s1706, 512, %s1708, [#allocation4], 128, 128, 8
    $region45: #{tpu_custom_call.1} parent=1 // pred_fallthru
      _
    // Predicated region
    $region46: #{tpu_custom_call.1} parent=1 // pred_check
      _
    $region47: #{tpu_custom_call.1} parent=1 // pred_check_branch
      %1715 = sbr.rel (0) target = $region49
    $region48: #{tpu_custom_call.1} parent=1 // pred_region
      %1717 = dma.done [#allocation4], 512
    $region49: #{tpu_custom_call.1} parent=1 // pred_fallthru
      _
    %1718 = vsyncpa [#allocation3], 1
    %1719 = vsyncpa [#allocation4], 1

</llo_original>
